<compile_context>
chip_gen: v7x
topology: tpu7x:2x2x1
jax: 0.10.0
libtpu: 0.0.40
codegen_flags: <defaults>
</compile_context>

<pallas_src>
import jax
import jax.numpy as jnp
import numpy as np
from jax.experimental import pallas as pl
from jax.experimental.pallas import tpu as pltpu

RELU_SLOPE = 0.1

# Set to jnp.bfloat16 for v6e/v7x deployments (full-rate MXU, half the weight
# traffic); kept f32 here so the self-check against the XLA reference is tight.
# Accumulation is always f32 via preferred_element_type.
MXU_DTYPE = jnp.float32

CONFIG = dict(
    n_mels=8,
    gen_channels=[16, 8],
    gen_n_layers=1,
    gen_prenet_ksize=7,
    gen_ksizes=[4],
    gen_strides=[2],
    gen_paddings=[1],
    gen_postnet_ksize=7,
    gen_relu_slope=RELU_SLOPE,
    resblock_ksizes=[3, 5],
    resblock_dilations=[[[1, 2]], [[1], [3]]],
)


def _leaky(x, slope):
    return jnp.where(x >= 0, x, slope * x)


def _const_spec(shape):
    nd = len(shape)
    return pl.BlockSpec(shape, lambda bb: (0,) * nd)


# ---------------------------------------------------------------------------
# In-kernel helper: offset/dilated conv of a (C_in, T) slab.
# Builds an im2col slab (n_taps*C_in, T) in a VMEM scratch (zero padding is
# written straight into the slab, never materialized in HBM) and issues a
# single (C_out, n_taps*C_in) @ (n_taps*C_in, T) MXU matmul.
#   y[:, t] = sum_i  W_i @ x[:, t + offsets[i]]   (zero outside [0, T))
# ---------------------------------------------------------------------------
def _tap_conv(x, w, b, offsets, slab_ref):
    C, T = x.shape
    rows = len(offsets) * C
    for i, off in enumerate(offsets):
        r0, r1 = i * C, (i + 1) * C
        lo = max(0, -off)
        hi = min(T, T - off)
        if lo >= hi:  # tap entirely out of range (not hit at these shapes)
            slab_ref[r0:r1, :] = jnp.zeros((C, T), jnp.float32)
            continue
        if lo > 0:
            slab_ref[r0:r1, 0:lo] = jnp.zeros((C, lo), jnp.float32)
        if hi < T:
            slab_ref[r0:r1, hi:T] = jnp.zeros((C, T - hi), jnp.float32)
        slab_ref[r0:r1, lo:hi] = x[:, lo + off:hi + off]
    slab = slab_ref[0:rows, :]
    y = jnp.dot(w.astype(MXU_DTYPE), slab.astype(MXU_DTYPE),
                preferred_element_type=jnp.float32)
    return y + b


# ---------------------------------------------------------------------------
# Single dilated 'same' conv (prenet / postnet), optional fused input
# LeakyReLU and output Tanh.
# ---------------------------------------------------------------------------
def _make_conv_kernel(offsets, relu_slope, tanh_out):
    def kernel(x_ref, w_ref, b_ref, o_ref, slab_ref):
        x = x_ref[0].astype(jnp.float32)            # (C_in, T)
        if relu_slope is not None:
            x = _leaky(x, relu_slope)
        y = _tap_conv(x, w_ref[...], b_ref[...].astype(jnp.float32),
                      offsets, slab_ref)
        if tanh_out:
            y = jnp.tanh(y)
        o_ref[0] = y.astype(o_ref.dtype)            # (C_out, T): lane-dense in T
    return kernel


def conv_same_pallas(x, p, relu_slope=None, tanh_out=False):
    """x: (B, C_in, T) -> (B, C_out, T)."""
    B, C_in, T = x.shape
    C_out, rows = p["w"].shape
    kernel = _make_conv_kernel(p["offsets"], relu_slope, tanh_out)
    cost = pl.CostEstimate(
        flops=2 * B * T * rows * C_out,
        transcendentals=B * C_out * T if tanh_out else 0,
        bytes_accessed=4 * (x.size + p["w"].size + p["b"].size + B * C_out * T))
    return pl.pallas_call(
        kernel,
        out_shape=jax.ShapeDtypeStruct((B, C_out, T), x.dtype),
        grid=(B,),
        in_specs=[pl.BlockSpec((1, C_in, T), lambda bb: (bb, 0, 0)),
                  _const_spec(p["w"].shape),
                  _const_spec(p["b"].shape)],
        out_specs=pl.BlockSpec((1, C_out, T), lambda bb: (bb, 0, 0)),
        scratch_shapes=[pltpu.VMEM((rows, T), jnp.float32)],
        compiler_params=pltpu.CompilerParams(dimension_semantics=("parallel",)),
        cost_estimate=cost,
    )(x, p["w"], p["b"])


# ---------------------------------------------------------------------------
# Fused LeakyReLU + polyphase ConvTranspose1d.  No zero-stuffing: each output
# phase ph (t = m*stride + ph) is a small valid conv of the un-stuffed input
# with its own taps/offsets; phases are interleaved by one XLA transpose.
# ---------------------------------------------------------------------------
def _make_convt_kernel(stride, c_out, phase_offsets, relu_slope):
    def kernel(*refs):
        x_ref = refs[0]
        w_refs = refs[1:1 + stride]
        b_ref = refs[1 + stride]
        o_ref = refs[2 + stride]
        slab_ref = refs[3 + stride]
        x = _leaky(x_ref[0].astype(jnp.float32), relu_slope)    # fused LeakyReLU
        b = b_ref[...].astype(jnp.float32)
        for ph in range(stride):
            y = _tap_conv(x, w_refs[ph][...], b, phase_offsets[ph], slab_ref)
            o_ref[0, ph * c_out:(ph + 1) * c_out, :] = y.astype(o_ref.dtype)
    return kernel


def conv_transpose_pallas(x, p, relu_slope):
    """x: (B, C_in, T) -> (B, C_out, stride*T)."""
    B, C_in, T = x.shape
    stride, C_out = p["stride"], p["C_out"]
    max_rows = max(len(o) for o in p["offsets"]) * C_in
    n_taps = sum(len(o) for o in p["offsets"])
    kernel = _make_convt_kernel(stride, C_out, p["offsets"], relu_slope)
    in_specs = [pl.BlockSpec((1, C_in, T), lambda bb: (bb, 0, 0))]
    in_specs += [_const_spec(wp.shape) for wp in p["w_phases"]]
    in_specs += [_const_spec(p["b"].shape)]
    cost = pl.CostEstimate(
        flops=2 * B * T * C_in * C_out * n_taps,
        transcendentals=0,
        bytes_accessed=4 * (x.size + sum(w.size for w in p["w_phases"])
                            + B * stride * C_out * T))
    out = pl.pallas_call(
        kernel,
        out_shape=jax.ShapeDtypeStruct((B, stride * C_out, T), x.dtype),
        grid=(B,),
        in_specs=in_specs,
        out_specs=pl.BlockSpec((1, stride * C_out, T), lambda bb: (bb, 0, 0)),
        scratch_shapes=[pltpu.VMEM((max_rows, T), jnp.float32)],
        compiler_params=pltpu.CompilerParams(dimension_semantics=("parallel",)),
        cost_estimate=cost,
    )(x, *p["w_phases"], p["b"])
    # Interleave phases: row ph*C_out+c at time m -> output time m*stride+ph.
    out = out.reshape(B, stride, C_out, T)
    return jnp.transpose(out, (0, 2, 3, 1)).reshape(B, C_out, stride * T)


# ---------------------------------------------------------------------------
# Whole MRF for one upsample stage fused into a single kernel: for each
# ResBlock r = h; r = r + conv_seq(r) (sequential); output = mean over blocks.
# All intermediate activations stay in VMEM.
# ---------------------------------------------------------------------------
def _make_mrf_kernel(structure, relu_slope, n_resblocks):
    def kernel(*refs):
        x_ref, o_ref, slab_ref = refs[0], refs[-2], refs[-1]
        wb = refs[1:-2]
        h = x_ref[0].astype(jnp.float32)            # (C, T)
        idx = 0
        total = None
        for rb in structure:                        # every ResBlock reads the same h
            r = h
            for seq in rb:                          # x = x + conv_seq(x), sequential
                y = r
                for offsets in seq:                 # LeakyReLU -> dilated conv (fused)
                    w = wb[2 * idx][...]
                    b = wb[2 * idx + 1][...].astype(jnp.float32)
                    idx += 1
                    y = _tap_conv(_leaky(y, relu_slope), w, b, offsets, slab_ref)
                r = r + y
            total = r if total is None else total + r
        o_ref[0] = (total * (1.0 / n_resblocks)).astype(o_ref.dtype)
    return kernel


def mrf_pallas(x, mrf, relu_slope):
    B, C, T = x.shape
    structure = tuple(tuple(tuple(c["offsets"] for c in seq) for seq in rb)
                      for rb in mrf)
    flat, in_specs = [], [pl.BlockSpec((1, C, T), lambda bb: (bb, 0, 0))]
    max_rows, flops, wbytes = 8, 0, 0
    for rb in mrf:
        for seq in rb:
            for c in seq:
                flat += [c["w"], c["b"]]
                in_specs += [_const_spec(c["w"].shape), _const_spec(c["b"].shape)]
                rows = c["w"].shape[1]
                max_rows = max(max_rows, rows)
                flops += 2 * B * T * rows * C
                wbytes += 4 * (c["w"].size + c["b"].size)
    kernel = _make_mrf_kernel(structure, relu_slope, len(mrf))
    cost = pl.CostEstimate(flops=flops, transcendentals=0,
                           bytes_accessed=8 * x.size + wbytes)
    return pl.pallas_call(
        kernel,
        out_shape=jax.ShapeDtypeStruct((B, C, T), x.dtype),
        grid=(B,),
        in_specs=in_specs,
        out_specs=pl.BlockSpec((1, C, T), lambda bb: (bb, 0, 0)),
        scratch_shapes=[pltpu.VMEM((max_rows, T), jnp.float32)],
        compiler_params=pltpu.CompilerParams(dimension_semantics=("parallel",)),
        cost_estimate=cost,
    )(x, *flat)


# ---------------------------------------------------------------------------
# Generator forward (Pallas path).
# ---------------------------------------------------------------------------
def generator_forward(pparams, x):
    """x: (B, n_mels, T) NCW -> (B, 1, T * prod(strides)) NCW."""
    h = conv_same_pallas(x, pparams["prenet"])
    for layer in pparams["ups"]:
        h = conv_transpose_pallas(h, layer["convt"], RELU_SLOPE)  # LeakyReLU fused
        h = mrf_pallas(h, layer["mrf"], RELU_SLOPE)
    return conv_same_pallas(h, pparams["post"], relu_slope=RELU_SLOPE,
                            tanh_out=True)


# ---------------------------------------------------------------------------
# Parameter init (canonical PyTorch layouts) and conversion to kernel form.
# weight_norm is folded: effective weights are stored directly.
# ---------------------------------------------------------------------------
def init_params(key, cfg):
    keys = iter(jax.random.split(key, 64))

    def w_init(shape):
        return jax.random.normal(next(keys), shape, jnp.float32) * 0.1

    params = {
        "prenet": {"w": w_init((cfg["gen_channels"][0], cfg["n_mels"],
                                cfg["gen_prenet_ksize"])),      # (C_out, C_in, K)
                   "b": w_init((cfg["gen_channels"][0],))},
        "ups": [],
    }
    for i in range(cfg["gen_n_layers"]):
        in_c, out_c = cfg["gen_channels"][i], cfg["gen_channels"][i + 1]
        layer = {
            "convt": {"w": w_init((in_c, out_c, cfg["gen_ksizes"][i])),  # (C_in, C_out, K)
                      "b": w_init((out_c,)),
                      "stride": cfg["gen_strides"][i],
                      "padding": cfg["gen_paddings"][i]},
            "mrf": [],
        }
        for dilations, ksize in zip(cfg["resblock_dilations"],
                                    cfg["resblock_ksizes"]):
            rb = []
            for dil_seq in dilations:
                rb.append([{"w": w_init((out_c, out_c, ksize)),          # (C_out, C_in, K)
                            "b": w_init((out_c,)), "dilation": d}
                           for d in dil_seq])
            layer["mrf"].append(rb)
        params["ups"].append(layer)
    params["post"] = {"w": w_init((1, cfg["gen_channels"][-1],
                                   cfg["gen_postnet_ksize"])),
                      "b": w_init((1,))}
    return params


def _conv_kernel_form(w, b, dilation):
    C_out, C_in, K = w.shape
    w2 = jnp.transpose(w, (0, 2, 1)).reshape(C_out, K * C_in)  # tap-major rows
    pad_l = dilation * (K - 1) // 2
    offsets = tuple(k * dilation - pad_l for k in range(K))
    return {"w": w2, "b": b.reshape(C_out, 1), "offsets": offsets}


def _convt_kernel_form(w, b, stride, padding):
    C_in, C_out, K = w.shape
    assert K - stride - 2 * padding == 0, (
        "polyphase ConvTranspose path assumes T_out == stride * T")
    w_phases, offsets = [], []
    for ph in range(stride):
        ks = [k for k in range(K) if k % stride == (ph + padding) % stride]
        offsets.append(tuple((ph + padding - k) // stride for k in ks))
        w_phases.append(jnp.concatenate([w[:, :, k].T for k in ks], axis=1))
    return {"w_phases": w_phases, "offsets": tuple(offsets),
            "b": b.reshape(C_out, 1), "stride": stride, "C_out": C_out}


def prepare_pallas_params(params):
    pp = {
        "prenet": _conv_kernel_form(params["prenet"]["w"], params["prenet"]["b"], 1),
        "post": _conv_kernel_form(params["post"]["w"], params["post"]["b"], 1),
        "ups": [],
    }
    for layer in params["ups"]:
        ct = layer["convt"]
        pp["ups"].append({
            "convt": _convt_kernel_form(ct["w"], ct["b"], ct["stride"], ct["padding"]),
            "mrf": [[[_conv_kernel_form(c["w"], c["b"], c["dilation"]) for c in seq]
                     for seq in rb] for rb in layer["mrf"]],
        })
    return pp


# ---------------------------------------------------------------------------
# Pure-XLA reference, a direct translation of the PyTorch module semantics
# (used for the correctness check of the Pallas path).
# ---------------------------------------------------------------------------
def _ref_conv_same(x, w, b, dilation):
    K = w.shape[-1]
    total = dilation * (K - 1)
    pad_l = total // 2
    y = jax.lax.conv_general_dilated(
        x, w, window_strides=(1,), padding=[(pad_l, total - pad_l)],
        rhs_dilation=(dilation,), dimension_numbers=("NCH", "OIH", "NCH"))
    return y + b[None, :, None]


def _ref_conv_transpose(x, w, b, stride, padding):
    K = w.shape[-1]
    wf = jnp.flip(jnp.transpose(w, (1, 0, 2)), axis=-1)   # (C_out, C_in, K) flipped
    y = jax.lax.conv_general_dilated(
        x, wf, window_strides=(1,),
        padding=[(K - 1 - padding, K - 1 - padding)],
        lhs_dilation=(stride,), dimension_numbers=("NCH", "OIH", "NCH"))
    return y + b[None, :, None]


def generator_forward_ref(params, x):
    h = _ref_conv_same(x, params["prenet"]["w"], params["prenet"]["b"], 1)
    for layer in params["ups"]:
        ct = layer["convt"]
        h = _ref_conv_transpose(_leaky(h, RELU_SLOPE), ct["w"], ct["b"],
                                ct["stride"], ct["padding"])
        s = jnp.zeros_like(h)
        for rb in layer["mrf"]:
            r = h
            for seq in rb:
                y = r
                for c in seq:
                    y = _ref_conv_same(_leaky(y, RELU_SLOPE), c["w"], c["b"],
                                       c["dilation"])
                r = r + y
            s = s + r
        h = s / len(layer["mrf"])
    h = _ref_conv_same(_leaky(h, RELU_SLOPE), params["post"]["w"],
                       params["post"]["b"], 1)
    return jnp.tanh(h)


if __name__ == "__main__":
    key = jax.random.PRNGKey(0)
    k_param, k_x = jax.random.split(key)
    params = init_params(k_param, CONFIG)
    pparams = prepare_pallas_params(params)

    B, T = 2, 16
    x = jax.random.normal(k_x, (B, CONFIG["n_mels"], T), jnp.float32)  # NCW mel

    fwd = jax.jit(lambda inp: generator_forward(pparams, inp))
    y = jax.block_until_ready(fwd(x))

    T_out = T * int(np.prod(CONFIG["gen_strides"]))
    assert y.shape == (B, 1, T_out), y.shape

    y_ref = jax.block_until_ready(generator_forward_ref(params, x))
    err = float(np.max(np.abs(np.asarray(y) - np.asarray(y_ref))))
    assert err < 1e-3, f"max abs error {err}"

    print("KERNEL_OK")
</pallas_src>

<mosaic_0001>
module attributes {stable_mosaic.version = 11 : i64} {
  func.func @kernel(%arg0: i32, %arg1: memref<1x16x16xf32, #tpu.memory_space<vmem>>, %arg2: memref<8x32xf32, #tpu.memory_space<vmem>>, %arg3: memref<8x32xf32, #tpu.memory_space<vmem>>, %arg4: memref<8x1xf32, #tpu.memory_space<vmem>>, %arg5: memref<1x16x16xf32, #tpu.memory_space<vmem>>, %arg6: memref<32x16xf32, #tpu.memory_space<vmem>>) attributes {dimension_semantics = [#tpu.dimension_semantics<parallel>], iteration_bounds = array<i64: 2>, scalar_prefetch = 0 : i64, scratch_operands = 1 : i64, tpu.core_type = #tpu.core_type<tc>, window_params = [{transform_indices = @transform_0, window_bounds = array<i64: 1, 16, 16>}, {pipeline_mode = #tpu.pipeline_mode<synchronous>, transform_indices = @transform_1, window_bounds = array<i64: 8, 32>}, {pipeline_mode = #tpu.pipeline_mode<synchronous>, transform_indices = @transform_2, window_bounds = array<i64: 8, 32>}, {pipeline_mode = #tpu.pipeline_mode<synchronous>, transform_indices = @transform_3, window_bounds = array<i64: 8, 1>}, {transform_indices = @transform_4, window_bounds = array<i64: 1, 16, 16>}]} {
    %c0 = arith.constant 0 : index
    %c0_0 = arith.constant 0 : index
    %c0_1 = arith.constant 0 : index
    %0 = vector.load %arg1[%c0, %c0_0, %c0_1] : memref<1x16x16xf32, #tpu.memory_space<vmem>>, vector<1x16x16xf32>
    %1 = vector.shape_cast %0 : vector<1x16x16xf32> to vector<16x16xf32>
    %cst = arith.constant 0.000000e+00 : f32
    %2 = vector.broadcast %cst : f32 to vector<16x16xf32>
    %3 = arith.cmpf oge, %1, %2 : vector<16x16xf32>
    %cst_2 = arith.constant 1.000000e-01 : f32
    %4 = vector.broadcast %cst_2 : f32 to vector<16x16xf32>
    %5 = arith.mulf %4, %1 : vector<16x16xf32>
    %6 = arith.select %3, %1, %5 : vector<16x16xi1>, vector<16x16xf32>
    %c0_3 = arith.constant 0 : index
    %c0_4 = arith.constant 0 : index
    %7 = vector.load %arg4[%c0_3, %c0_4] : memref<8x1xf32, #tpu.memory_space<vmem>>, vector<8x1xf32>
    %c0_5 = arith.constant 0 : index
    %c0_6 = arith.constant 0 : index
    %8 = vector.load %arg2[%c0_5, %c0_6] : memref<8x32xf32, #tpu.memory_space<vmem>>, vector<8x32xf32>
    %c0_7 = arith.constant 0 : index
    %c0_8 = arith.constant 0 : index
    %9 = vector.load %arg6[%c0_7, %c0_8] : memref<32x16xf32, #tpu.memory_space<vmem>>, vector<16x16xf32>
    tpu.vector_store %arg6[%c0_7, %c0_8], %6 {strides = array<i32>} : memref<32x16xf32, #tpu.memory_space<vmem>>, vector<16x16xf32>,
    %cst_9 = arith.constant 0.000000e+00 : f32
    %10 = vector.broadcast %cst_9 : f32 to vector<16x1xf32>
    %c16 = arith.constant 16 : index
    %c0_10 = arith.constant 0 : index
    %11 = vector.load %arg6[%c16, %c0_10] : memref<32x16xf32, #tpu.memory_space<vmem>>, vector<16x1xf32>
    tpu.vector_store %arg6[%c16, %c0_10], %10 {strides = array<i32>} : memref<32x16xf32, #tpu.memory_space<vmem>>, vector<16x1xf32>,
    %12 = vector.extract_strided_slice %6 {offsets = [0, 0], sizes = [16, 15], strides = [1, 1]} : vector<16x16xf32> to vector<16x15xf32>
    %c16_11 = arith.constant 16 : index
    %c1 = arith.constant 1 : index
    %13 = vector.load %arg6[%c16_11, %c1] : memref<32x16xf32, #tpu.memory_space<vmem>>, vector<16x15xf32>
    tpu.vector_store %arg6[%c16_11, %c1], %12 {strides = array<i32>} : memref<32x16xf32, #tpu.memory_space<vmem>>, vector<16x15xf32>,
    %c0_12 = arith.constant 0 : index
    %c0_13 = arith.constant 0 : index
    %14 = vector.load %arg6[%c0_12, %c0_13] : memref<32x16xf32, #tpu.memory_space<vmem>>, vector<32x16xf32>
    %cst_14 = arith.constant dense<0.000000e+00> : vector<8x16xf32>
    %15 = tpu.matmul %8, %14, %cst_14 {dimension_numbers = #tpu.dot_dimension_numbers<[1], [0], [0], [1], [0, 0, 1, 1], [], []>} : vector<8x32xf32>, vector<32x16xf32>, vector<8x16xf32> -> vector<8x16xf32>
    %16 = vector.broadcast %7 : vector<8x1xf32> to vector<8x16xf32>
    %17 = arith.addf %15, %16 : vector<8x16xf32>
    %c0_15 = arith.constant 0 : index
    %c0_16 = arith.constant 0 : index
    %c0_17 = arith.constant 0 : index
    %18 = vector.load %arg5[%c0_15, %c0_16, %c0_17] : memref<1x16x16xf32, #tpu.memory_space<vmem>>, vector<1x8x16xf32>
    %19 = vector.shape_cast %18 : vector<1x8x16xf32> to vector<8x16xf32>
    %20 = vector.shape_cast %17 : vector<8x16xf32> to vector<1x8x16xf32>
    tpu.vector_store %arg5[%c0_15, %c0_16, %c0_17], %20 {strides = array<i32>} : memref<1x16x16xf32, #tpu.memory_space<vmem>>, vector<1x8x16xf32>,
    %c0_18 = arith.constant 0 : index
    %c0_19 = arith.constant 0 : index
    %21 = vector.load %arg3[%c0_18, %c0_19] : memref<8x32xf32, #tpu.memory_space<vmem>>, vector<8x32xf32>
    %cst_20 = arith.constant 0.000000e+00 : f32
    %22 = vector.broadcast %cst_20 : f32 to vector<16x1xf32>
    %c0_21 = arith.constant 0 : index
    %c15 = arith.constant 15 : index
    %23 = vector.load %arg6[%c0_21, %c15] : memref<32x16xf32, #tpu.memory_space<vmem>>, vector<16x1xf32>
    tpu.vector_store %arg6[%c0_21, %c15], %22 {strides = array<i32>} : memref<32x16xf32, #tpu.memory_space<vmem>>, vector<16x1xf32>,
    %24 = vector.extract_strided_slice %6 {offsets = [0, 1], sizes = [16, 15], strides = [1, 1]} : vector<16x16xf32> to vector<16x15xf32>
    %c0_22 = arith.constant 0 : index
    %c0_23 = arith.constant 0 : index
    %25 = vector.load %arg6[%c0_22, %c0_23] : memref<32x16xf32, #tpu.memory_space<vmem>>, vector<16x15xf32>
    tpu.vector_store %arg6[%c0_22, %c0_23], %24 {strides = array<i32>} : memref<32x16xf32, #tpu.memory_space<vmem>>, vector<16x15xf32>,
    %c16_24 = arith.constant 16 : index
    %c0_25 = arith.constant 0 : index
    %26 = vector.load %arg6[%c16_24, %c0_25] : memref<32x16xf32, #tpu.memory_space<vmem>>, vector<16x16xf32>
    tpu.vector_store %arg6[%c16_24, %c0_25], %6 {strides = array<i32>} : memref<32x16xf32, #tpu.memory_space<vmem>>, vector<16x16xf32>,
    %c0_26 = arith.constant 0 : index
    %c0_27 = arith.constant 0 : index
    %27 = vector.load %arg6[%c0_26, %c0_27] : memref<32x16xf32, #tpu.memory_space<vmem>>, vector<32x16xf32>
    %cst_28 = arith.constant dense<0.000000e+00> : vector<8x16xf32>
    %28 = tpu.matmul %21, %27, %cst_28 {dimension_numbers = #tpu.dot_dimension_numbers<[1], [0], [0], [1], [0, 0, 1, 1], [], []>} : vector<8x32xf32>, vector<32x16xf32>, vector<8x16xf32> -> vector<8x16xf32>
    %29 = vector.broadcast %7 : vector<8x1xf32> to vector<8x16xf32>
    %30 = arith.addf %28, %29 : vector<8x16xf32>
    %c0_29 = arith.constant 0 : index
    %c8 = arith.constant 8 : index
    %c0_30 = arith.constant 0 : index
    %31 = vector.load %arg5[%c0_29, %c8, %c0_30] : memref<1x16x16xf32, #tpu.memory_space<vmem>>, vector<1x8x16xf32>
    %32 = vector.shape_cast %31 : vector<1x8x16xf32> to vector<8x16xf32>
    %33 = vector.shape_cast %30 : vector<8x16xf32> to vector<1x8x16xf32>
    tpu.vector_store %arg5[%c0_29, %c8, %c0_30], %33 {strides = array<i32>} : memref<1x16x16xf32, #tpu.memory_space<vmem>>, vector<1x8x16xf32>,
    return
  }
  func.func @transform_0(%arg0: i32) -> (i32, i32, i32) {
    %c0_i32 = arith.constant 0 : i32
    %c0_i32_0 = arith.constant 0 : i32
    %c0_i32_1 = arith.constant 0 : i32
    return %arg0, %c0_i32, %c0_i32_0 : i32, i32, i32
  }
  func.func @transform_1(%arg0: i32) -> (i32, i32) {
    %c0_i32 = arith.constant 0 : i32
    %c0_i32_0 = arith.constant 0 : i32
    %c0_i32_1 = arith.constant 0 : i32
    return %c0_i32, %c0_i32_0 : i32, i32
  }
  func.func @transform_2(%arg0: i32) -> (i32, i32) {
    %c0_i32 = arith.constant 0 : i32
    %c0_i32_0 = arith.constant 0 : i32
    %c0_i32_1 = arith.constant 0 : i32
    return %c0_i32, %c0_i32_0 : i32, i32
  }
  func.func @transform_3(%arg0: i32) -> (i32, i32) {
    %c0_i32 = arith.constant 0 : i32
    %c0_i32_0 = arith.constant 0 : i32
    %c0_i32_1 = arith.constant 0 : i32
    return %c0_i32, %c0_i32_0 : i32, i32
  }
  func.func @transform_4(%arg0: i32) -> (i32, i32, i32) {
    %c0_i32 = arith.constant 0 : i32
    %c0_i32_0 = arith.constant 0 : i32
    %c0_i32_1 = arith.constant 0 : i32
    return %arg0, %c0_i32, %c0_i32_0 : i32, i32, i32
  }
}

module attributes {stable_mosaic.version = 11 : i64} {
  func.func @kernel(%arg0: i32, %arg1: memref<1x8x16xf32, #tpu.memory_space<vmem>>, %arg2: memref<16x56xf32, #tpu.memory_space<vmem>>, %arg3: memref<16x1xf32, #tpu.memory_space<vmem>>, %arg4: memref<1x16x16xf32, #tpu.memory_space<vmem>>, %arg5: memref<56x16xf32, #tpu.memory_space<vmem>>) attributes {dimension_semantics = [#tpu.dimension_semantics<parallel>], iteration_bounds = array<i64: 2>, scalar_prefetch = 0 : i64, scratch_operands = 1 : i64, tpu.core_type = #tpu.core_type<tc>, window_params = [{transform_indices = @transform_0, window_bounds = array<i64: 1, 8, 16>}, {pipeline_mode = #tpu.pipeline_mode<synchronous>, transform_indices = @transform_1, window_bounds = array<i64: 16, 56>}, {pipeline_mode = #tpu.pipeline_mode<synchronous>, transform_indices = @transform_2, window_bounds = array<i64: 16, 1>}, {transform_indices = @transform_3, window_bounds = array<i64: 1, 16, 16>}]} {
    %c0 = arith.constant 0 : index
    %c0_0 = arith.constant 0 : index
    %c0_1 = arith.constant 0 : index
    %0 = vector.load %arg1[%c0, %c0_0, %c0_1] : memref<1x8x16xf32, #tpu.memory_space<vmem>>, vector<1x8x16xf32>
    %1 = vector.shape_cast %0 : vector<1x8x16xf32> to vector<8x16xf32>
    %c0_2 = arith.constant 0 : index
    %c0_3 = arith.constant 0 : index
    %2 = vector.load %arg2[%c0_2, %c0_3] : memref<16x56xf32, #tpu.memory_space<vmem>>, vector<16x56xf32>
    %c0_4 = arith.constant 0 : index
    %c0_5 = arith.constant 0 : index
    %3 = vector.load %arg3[%c0_4, %c0_5] : memref<16x1xf32, #tpu.memory_space<vmem>>, vector<16x1xf32>
    %cst = arith.constant 0.000000e+00 : f32
    %4 = vector.broadcast %cst : f32 to vector<8x3xf32>
    %c0_6 = arith.constant 0 : index
    %c0_7 = arith.constant 0 : index
    %5 = vector.load %arg5[%c0_6, %c0_7] : memref<56x16xf32, #tpu.memory_space<vmem>>, vector<8x3xf32>
    tpu.vector_store %arg5[%c0_6, %c0_7], %4 {strides = array<i32>} : memref<56x16xf32, #tpu.memory_space<vmem>>, vector<8x3xf32>,
    %6 = vector.extract_strided_slice %1 {offsets = [0, 0], sizes = [8, 13], strides = [1, 1]} : vector<8x16xf32> to vector<8x13xf32>
    %c0_8 = arith.constant 0 : index
    %c3 = arith.constant 3 : index
    %7 = vector.load %arg5[%c0_8, %c3] : memref<56x16xf32, #tpu.memory_space<vmem>>, vector<8x13xf32>
    tpu.vector_store %arg5[%c0_8, %c3], %6 {strides = array<i32>} : memref<56x16xf32, #tpu.memory_space<vmem>>, vector<8x13xf32>,
    %cst_9 = arith.constant 0.000000e+00 : f32
    %8 = vector.broadcast %cst_9 : f32 to vector<8x2xf32>
    %c8 = arith.constant 8 : index
    %c0_10 = arith.constant 0 : index
    %9 = vector.load %arg5[%c8, %c0_10] : memref<56x16xf32, #tpu.memory_space<vmem>>, vector<8x2xf32>
    tpu.vector_store %arg5[%c8, %c0_10], %8 {strides = array<i32>} : memref<56x16xf32, #tpu.memory_space<vmem>>, vector<8x2xf32>,
    %10 = vector.extract_strided_slice %1 {offsets = [0, 0], sizes = [8, 14], strides = [1, 1]} : vector<8x16xf32> to vector<8x14xf32>
    %c8_11 = arith.constant 8 : index
    %c2 = arith.constant 2 : index
    %11 = vector.load %arg5[%c8_11, %c2] : memref<56x16xf32, #tpu.memory_space<vmem>>, vector<8x14xf32>
    tpu.vector_store %arg5[%c8_11, %c2], %10 {strides = array<i32>} : memref<56x16xf32, #tpu.memory_space<vmem>>, vector<8x14xf32>,
    %cst_12 = arith.constant 0.000000e+00 : f32
    %12 = vector.broadcast %cst_12 : f32 to vector<8x1xf32>
    %c16 = arith.constant 16 : index
    %c0_13 = arith.constant 0 : index
    %13 = vector.load %arg5[%c16, %c0_13] : memref<56x16xf32, #tpu.memory_space<vmem>>, vector<8x1xf32>
    tpu.vector_store %arg5[%c16, %c0_13], %12 {strides = array<i32>} : memref<56x16xf32, #tpu.memory_space<vmem>>, vector<8x1xf32>,
    %14 = vector.extract_strided_slice %1 {offsets = [0, 0], sizes = [8, 15], strides = [1, 1]} : vector<8x16xf32> to vector<8x15xf32>
    %c16_14 = arith.constant 16 : index
    %c1 = arith.constant 1 : index
    %15 = vector.load %arg5[%c16_14, %c1] : memref<56x16xf32, #tpu.memory_space<vmem>>, vector<8x15xf32>
    tpu.vector_store %arg5[%c16_14, %c1], %14 {strides = array<i32>} : memref<56x16xf32, #tpu.memory_space<vmem>>, vector<8x15xf32>,
    %c24 = arith.constant 24 : index
    %c0_15 = arith.constant 0 : index
    %16 = vector.load %arg5[%c24, %c0_15] : memref<56x16xf32, #tpu.memory_space<vmem>>, vector<8x16xf32>
    tpu.vector_store %arg5[%c24, %c0_15], %1 {strides = array<i32>} : memref<56x16xf32, #tpu.memory_space<vmem>>, vector<8x16xf32>,
    %cst_16 = arith.constant 0.000000e+00 : f32
    %17 = vector.broadcast %cst_16 : f32 to vector<8x1xf32>
    %c32 = arith.constant 32 : index
    %c15 = arith.constant 15 : index
    %18 = vector.load %arg5[%c32, %c15] : memref<56x16xf32, #tpu.memory_space<vmem>>, vector<8x1xf32>
    tpu.vector_store %arg5[%c32, %c15], %17 {strides = array<i32>} : memref<56x16xf32, #tpu.memory_space<vmem>>, vector<8x1xf32>,
    %19 = vector.extract_strided_slice %1 {offsets = [0, 1], sizes = [8, 15], strides = [1, 1]} : vector<8x16xf32> to vector<8x15xf32>
    %c32_17 = arith.constant 32 : index
    %c0_18 = arith.constant 0 : index
    %20 = vector.load %arg5[%c32_17, %c0_18] : memref<56x16xf32, #tpu.memory_space<vmem>>, vector<8x15xf32>
    tpu.vector_store %arg5[%c32_17, %c0_18], %19 {strides = array<i32>} : memref<56x16xf32, #tpu.memory_space<vmem>>, vector<8x15xf32>,
    %cst_19 = arith.constant 0.000000e+00 : f32
    %21 = vector.broadcast %cst_19 : f32 to vector<8x2xf32>
    %c40 = arith.constant 40 : index
    %c14 = arith.constant 14 : index
    %22 = vector.load %arg5[%c40, %c14] : memref<56x16xf32, #tpu.memory_space<vmem>>, vector<8x2xf32>
    tpu.vector_store %arg5[%c40, %c14], %21 {strides = array<i32>} : memref<56x16xf32, #tpu.memory_space<vmem>>, vector<8x2xf32>,
    %23 = vector.extract_strided_slice %1 {offsets = [0, 2], sizes = [8, 14], strides = [1, 1]} : vector<8x16xf32> to vector<8x14xf32>
    %c40_20 = arith.constant 40 : index
    %c0_21 = arith.constant 0 : index
    %24 = vector.load %arg5[%c40_20, %c0_21] : memref<56x16xf32, #tpu.memory_space<vmem>>, vector<8x14xf32>
    tpu.vector_store %arg5[%c40_20, %c0_21], %23 {strides = array<i32>} : memref<56x16xf32, #tpu.memory_space<vmem>>, vector<8x14xf32>,
    %cst_22 = arith.constant 0.000000e+00 : f32
    %25 = vector.broadcast %cst_22 : f32 to vector<8x3xf32>
    %c48 = arith.constant 48 : index
    %c13 = arith.constant 13 : index
    %26 = vector.load %arg5[%c48, %c13] : memref<56x16xf32, #tpu.memory_space<vmem>>, vector<8x3xf32>
    tpu.vector_store %arg5[%c48, %c13], %25 {strides = array<i32>} : memref<56x16xf32, #tpu.memory_space<vmem>>, vector<8x3xf32>,
    %27 = vector.extract_strided_slice %1 {offsets = [0, 3], sizes = [8, 13], strides = [1, 1]} : vector<8x16xf32> to vector<8x13xf32>
    %c48_23 = arith.constant 48 : index
    %c0_24 = arith.constant 0 : index
    %28 = vector.load %arg5[%c48_23, %c0_24] : memref<56x16xf32, #tpu.memory_space<vmem>>, vector<8x13xf32>
    tpu.vector_store %arg5[%c48_23, %c0_24], %27 {strides = array<i32>} : memref<56x16xf32, #tpu.memory_space<vmem>>, vector<8x13xf32>,
    %c0_25 = arith.constant 0 : index
    %c0_26 = arith.constant 0 : index
    %29 = vector.load %arg5[%c0_25, %c0_26] : memref<56x16xf32, #tpu.memory_space<vmem>>, vector<56x16xf32>
    %cst_27 = arith.constant dense<0.000000e+00> : vector<16x16xf32>
    %30 = tpu.matmul %2, %29, %cst_27 {dimension_numbers = #tpu.dot_dimension_numbers<[1], [0], [0], [1], [0, 0, 1, 1], [], []>} : vector<16x56xf32>, vector<56x16xf32>, vector<16x16xf32> -> vector<16x16xf32>
    %31 = vector.broadcast %3 : vector<16x1xf32> to vector<16x16xf32>
    %32 = arith.addf %30, %31 : vector<16x16xf32>
    %c0_28 = arith.constant 0 : index
    %c0_29 = arith.constant 0 : index
    %c0_30 = arith.constant 0 : index
    %33 = vector.load %arg4[%c0_28, %c0_29, %c0_30] : memref<1x16x16xf32, #tpu.memory_space<vmem>>, vector<1x16x16xf32>
    %34 = vector.shape_cast %33 : vector<1x16x16xf32> to vector<16x16xf32>
    %35 = vector.shape_cast %32 : vector<16x16xf32> to vector<1x16x16xf32>
    tpu.vector_store %arg4[%c0_28, %c0_29, %c0_30], %35 {strides = array<i32>} : memref<1x16x16xf32, #tpu.memory_space<vmem>>, vector<1x16x16xf32>,
    return
  }
  func.func @transform_0(%arg0: i32) -> (i32, i32, i32) {
    %c0_i32 = arith.constant 0 : i32
    %c0_i32_0 = arith.constant 0 : i32
    %c0_i32_1 = arith.constant 0 : i32
    return %arg0, %c0_i32, %c0_i32_0 : i32, i32, i32
  }
  func.func @transform_1(%arg0: i32) -> (i32, i32) {
    %c0_i32 = arith.constant 0 : i32
    %c0_i32_0 = arith.constant 0 : i32
    %c0_i32_1 = arith.constant 0 : i32
    return %c0_i32, %c0_i32_0 : i32, i32
  }
  func.func @transform_2(%arg0: i32) -> (i32, i32) {
    %c0_i32 = arith.constant 0 : i32
    %c0_i32_0 = arith.constant 0 : i32
    %c0_i32_1 = arith.constant 0 : i32
    return %c0_i32, %c0_i32_0 : i32, i32
  }
  func.func @transform_3(%arg0: i32) -> (i32, i32, i32) {
    %c0_i32 = arith.constant 0 : i32
    %c0_i32_0 = arith.constant 0 : i32
    %c0_i32_1 = arith.constant 0 : i32
    return %arg0, %c0_i32, %c0_i32_0 : i32, i32, i32
  }
}

module attributes {stable_mosaic.version = 11 : i64} {
  func.func @kernel(%arg0: i32, %arg1: memref<1x8x32xf32, #tpu.memory_space<vmem>>, %arg2: memref<1x56xf32, #tpu.memory_space<vmem>>, %arg3: memref<1x1xf32, #tpu.memory_space<vmem>>, %arg4: memref<1x1x32xf32, #tpu.memory_space<vmem>>, %arg5: memref<56x32xf32, #tpu.memory_space<vmem>>) attributes {dimension_semantics = [#tpu.dimension_semantics<parallel>], iteration_bounds = array<i64: 2>, scalar_prefetch = 0 : i64, scratch_operands = 1 : i64, tpu.core_type = #tpu.core_type<tc>, window_params = [{transform_indices = @transform_0, window_bounds = array<i64: 1, 8, 32>}, {pipeline_mode = #tpu.pipeline_mode<synchronous>, transform_indices = @transform_1, window_bounds = array<i64: 1, 56>}, {pipeline_mode = #tpu.pipeline_mode<synchronous>, transform_indices = @transform_2, window_bounds = array<i64: 1, 1>}, {transform_indices = @transform_3, window_bounds = array<i64: 1, 1, 32>}]} {
    %c0 = arith.constant 0 : index
    %c0_0 = arith.constant 0 : index
    %c0_1 = arith.constant 0 : index
    %0 = vector.load %arg1[%c0, %c0_0, %c0_1] : memref<1x8x32xf32, #tpu.memory_space<vmem>>, vector<1x8x32xf32>
    %1 = vector.shape_cast %0 : vector<1x8x32xf32> to vector<8x32xf32>
    %cst = arith.constant 0.000000e+00 : f32
    %2 = vector.broadcast %cst : f32 to vector<8x32xf32>
    %3 = arith.cmpf oge, %1, %2 : vector<8x32xf32>
    %cst_2 = arith.constant 1.000000e-01 : f32
    %4 = vector.broadcast %cst_2 : f32 to vector<8x32xf32>
    %5 = arith.mulf %4, %1 : vector<8x32xf32>
    %6 = arith.select %3, %1, %5 : vector<8x32xi1>, vector<8x32xf32>
    %c0_3 = arith.constant 0 : index
    %c0_4 = arith.constant 0 : index
    %7 = vector.load %arg2[%c0_3, %c0_4] : memref<1x56xf32, #tpu.memory_space<vmem>>, vector<1x56xf32>
    %c0_5 = arith.constant 0 : index
    %c0_6 = arith.constant 0 : index
    %8 = vector.load %arg3[%c0_5, %c0_6] : memref<1x1xf32, #tpu.memory_space<vmem>>, vector<1x1xf32>
    %cst_7 = arith.constant 0.000000e+00 : f32
    %9 = vector.broadcast %cst_7 : f32 to vector<8x3xf32>
    %c0_8 = arith.constant 0 : index
    %c0_9 = arith.constant 0 : index
    %10 = vector.load %arg5[%c0_8, %c0_9] : memref<56x32xf32, #tpu.memory_space<vmem>>, vector<8x3xf32>
    tpu.vector_store %arg5[%c0_8, %c0_9], %9 {strides = array<i32>} : memref<56x32xf32, #tpu.memory_space<vmem>>, vector<8x3xf32>,
    %11 = vector.extract_strided_slice %6 {offsets = [0, 0], sizes = [8, 29], strides = [1, 1]} : vector<8x32xf32> to vector<8x29xf32>
    %c0_10 = arith.constant 0 : index
    %c3 = arith.constant 3 : index
    %12 = vector.load %arg5[%c0_10, %c3] : memref<56x32xf32, #tpu.memory_space<vmem>>, vector<8x29xf32>
    tpu.vector_store %arg5[%c0_10, %c3], %11 {strides = array<i32>} : memref<56x32xf32, #tpu.memory_space<vmem>>, vector<8x29xf32>,
    %cst_11 = arith.constant 0.000000e+00 : f32
    %13 = vector.broadcast %cst_11 : f32 to vector<8x2xf32>
    %c8 = arith.constant 8 : index
    %c0_12 = arith.constant 0 : index
    %14 = vector.load %arg5[%c8, %c0_12] : memref<56x32xf32, #tpu.memory_space<vmem>>, vector<8x2xf32>
    tpu.vector_store %arg5[%c8, %c0_12], %13 {strides = array<i32>} : memref<56x32xf32, #tpu.memory_space<vmem>>, vector<8x2xf32>,
    %15 = vector.extract_strided_slice %6 {offsets = [0, 0], sizes = [8, 30], strides = [1, 1]} : vector<8x32xf32> to vector<8x30xf32>
    %c8_13 = arith.constant 8 : index
    %c2 = arith.constant 2 : index
    %16 = vector.load %arg5[%c8_13, %c2] : memref<56x32xf32, #tpu.memory_space<vmem>>, vector<8x30xf32>
    tpu.vector_store %arg5[%c8_13, %c2], %15 {strides = array<i32>} : memref<56x32xf32, #tpu.memory_space<vmem>>, vector<8x30xf32>,
    %cst_14 = arith.constant 0.000000e+00 : f32
    %17 = vector.broadcast %cst_14 : f32 to vector<8x1xf32>
    %c16 = arith.constant 16 : index
    %c0_15 = arith.constant 0 : index
    %18 = vector.load %arg5[%c16, %c0_15] : memref<56x32xf32, #tpu.memory_space<vmem>>, vector<8x1xf32>
    tpu.vector_store %arg5[%c16, %c0_15], %17 {strides = array<i32>} : memref<56x32xf32, #tpu.memory_space<vmem>>, vector<8x1xf32>,
    %19 = vector.extract_strided_slice %6 {offsets = [0, 0], sizes = [8, 31], strides = [1, 1]} : vector<8x32xf32> to vector<8x31xf32>
    %c16_16 = arith.constant 16 : index
    %c1 = arith.constant 1 : index
    %20 = vector.load %arg5[%c16_16, %c1] : memref<56x32xf32, #tpu.memory_space<vmem>>, vector<8x31xf32>
    tpu.vector_store %arg5[%c16_16, %c1], %19 {strides = array<i32>} : memref<56x32xf32, #tpu.memory_space<vmem>>, vector<8x31xf32>,
    %c24 = arith.constant 24 : index
    %c0_17 = arith.constant 0 : index
    %21 = vector.load %arg5[%c24, %c0_17] : memref<56x32xf32, #tpu.memory_space<vmem>>, vector<8x32xf32>
    tpu.vector_store %arg5[%c24, %c0_17], %6 {strides = array<i32>} : memref<56x32xf32, #tpu.memory_space<vmem>>, vector<8x32xf32>,
    %cst_18 = arith.constant 0.000000e+00 : f32
    %22 = vector.broadcast %cst_18 : f32 to vector<8x1xf32>
    %c32 = arith.constant 32 : index
    %c31 = arith.constant 31 : index
    %23 = vector.load %arg5[%c32, %c31] : memref<56x32xf32, #tpu.memory_space<vmem>>, vector<8x1xf32>
    tpu.vector_store %arg5[%c32, %c31], %22 {strides = array<i32>} : memref<56x32xf32, #tpu.memory_space<vmem>>, vector<8x1xf32>,
    %24 = vector.extract_strided_slice %6 {offsets = [0, 1], sizes = [8, 31], strides = [1, 1]} : vector<8x32xf32> to vector<8x31xf32>
    %c32_19 = arith.constant 32 : index
    %c0_20 = arith.constant 0 : index
    %25 = vector.load %arg5[%c32_19, %c0_20] : memref<56x32xf32, #tpu.memory_space<vmem>>, vector<8x31xf32>
    tpu.vector_store %arg5[%c32_19, %c0_20], %24 {strides = array<i32>} : memref<56x32xf32, #tpu.memory_space<vmem>>, vector<8x31xf32>,
    %cst_21 = arith.constant 0.000000e+00 : f32
    %26 = vector.broadcast %cst_21 : f32 to vector<8x2xf32>
    %c40 = arith.constant 40 : index
    %c30 = arith.constant 30 : index
    %27 = vector.load %arg5[%c40, %c30] : memref<56x32xf32, #tpu.memory_space<vmem>>, vector<8x2xf32>
    tpu.vector_store %arg5[%c40, %c30], %26 {strides = array<i32>} : memref<56x32xf32, #tpu.memory_space<vmem>>, vector<8x2xf32>,
    %28 = vector.extract_strided_slice %6 {offsets = [0, 2], sizes = [8, 30], strides = [1, 1]} : vector<8x32xf32> to vector<8x30xf32>
    %c40_22 = arith.constant 40 : index
    %c0_23 = arith.constant 0 : index
    %29 = vector.load %arg5[%c40_22, %c0_23] : memref<56x32xf32, #tpu.memory_space<vmem>>, vector<8x30xf32>
    tpu.vector_store %arg5[%c40_22, %c0_23], %28 {strides = array<i32>} : memref<56x32xf32, #tpu.memory_space<vmem>>, vector<8x30xf32>,
    %cst_24 = arith.constant 0.000000e+00 : f32
    %30 = vector.broadcast %cst_24 : f32 to vector<8x3xf32>
    %c48 = arith.constant 48 : index
    %c29 = arith.constant 29 : index
    %31 = vector.load %arg5[%c48, %c29] : memref<56x32xf32, #tpu.memory_space<vmem>>, vector<8x3xf32>
    tpu.vector_store %arg5[%c48, %c29], %30 {strides = array<i32>} : memref<56x32xf32, #tpu.memory_space<vmem>>, vector<8x3xf32>,
    %32 = vector.extract_strided_slice %6 {offsets = [0, 3], sizes = [8, 29], strides = [1, 1]} : vector<8x32xf32> to vector<8x29xf32>
    %c48_25 = arith.constant 48 : index
    %c0_26 = arith.constant 0 : index
    %33 = vector.load %arg5[%c48_25, %c0_26] : memref<56x32xf32, #tpu.memory_space<vmem>>, vector<8x29xf32>
    tpu.vector_store %arg5[%c48_25, %c0_26], %32 {strides = array<i32>} : memref<56x32xf32, #tpu.memory_space<vmem>>, vector<8x29xf32>,
    %c0_27 = arith.constant 0 : index
    %c0_28 = arith.constant 0 : index
    %34 = vector.load %arg5[%c0_27, %c0_28] : memref<56x32xf32, #tpu.memory_space<vmem>>, vector<56x32xf32>
    %cst_29 = arith.constant dense<0.000000e+00> : vector<1x32xf32>
    %35 = tpu.matmul %7, %34, %cst_29 {dimension_numbers = #tpu.dot_dimension_numbers<[1], [0], [0], [1], [0, 0, 1, 1], [], []>} : vector<1x56xf32>, vector<56x32xf32>, vector<1x32xf32> -> vector<1x32xf32>
    %36 = vector.broadcast %8 : vector<1x1xf32> to vector<1x32xf32>
    %37 = arith.addf %35, %36 : vector<1x32xf32>
    %38 = math.tanh %37 : vector<1x32xf32>
    %c0_30 = arith.constant 0 : index
    %c0_31 = arith.constant 0 : index
    %c0_32 = arith.constant 0 : index
    %39 = vector.load %arg4[%c0_30, %c0_31, %c0_32] : memref<1x1x32xf32, #tpu.memory_space<vmem>>, vector<1x1x32xf32>
    %40 = vector.shape_cast %39 : vector<1x1x32xf32> to vector<1x32xf32>
    %41 = vector.shape_cast %38 : vector<1x32xf32> to vector<1x1x32xf32>
    tpu.vector_store %arg4[%c0_30, %c0_31, %c0_32], %41 {strides = array<i32>} : memref<1x1x32xf32, #tpu.memory_space<vmem>>, vector<1x1x32xf32>,
    return
  }
  func.func @transform_0(%arg0: i32) -> (i32, i32, i32) {
    %c0_i32 = arith.constant 0 : i32
    %c0_i32_0 = arith.constant 0 : i32
    %c0_i32_1 = arith.constant 0 : i32
    return %arg0, %c0_i32, %c0_i32_0 : i32, i32, i32
  }
  func.func @transform_1(%arg0: i32) -> (i32, i32) {
    %c0_i32 = arith.constant 0 : i32
    %c0_i32_0 = arith.constant 0 : i32
    %c0_i32_1 = arith.constant 0 : i32
    return %c0_i32, %c0_i32_0 : i32, i32
  }
  func.func @transform_2(%arg0: i32) -> (i32, i32) {
    %c0_i32 = arith.constant 0 : i32
    %c0_i32_0 = arith.constant 0 : i32
    %c0_i32_1 = arith.constant 0 : i32
    return %c0_i32, %c0_i32_0 : i32, i32
  }
  func.func @transform_3(%arg0: i32) -> (i32, i32, i32) {
    %c0_i32 = arith.constant 0 : i32
    %c0_i32_0 = arith.constant 0 : i32
    %c0_i32_1 = arith.constant 0 : i32
    return %arg0, %c0_i32, %c0_i32_0 : i32, i32, i32
  }
}

module attributes {stable_mosaic.version = 11 : i64} {
  func.func @kernel(%arg0: i32, %arg1: memref<1x8x32xf32, #tpu.memory_space<vmem>>, %arg2: memref<8x24xf32, #tpu.memory_space<vmem>>, %arg3: memref<8x1xf32, #tpu.memory_space<vmem>>, %arg4: memref<8x24xf32, #tpu.memory_space<vmem>>, %arg5: memref<8x1xf32, #tpu.memory_space<vmem>>, %arg6: memref<8x40xf32, #tpu.memory_space<vmem>>, %arg7: memref<8x1xf32, #tpu.memory_space<vmem>>, %arg8: memref<8x40xf32, #tpu.memory_space<vmem>>, %arg9: memref<8x1xf32, #tpu.memory_space<vmem>>, %arg10: memref<1x8x32xf32, #tpu.memory_space<vmem>>, %arg11: memref<40x32xf32, #tpu.memory_space<vmem>>) attributes {dimension_semantics = [#tpu.dimension_semantics<parallel>], iteration_bounds = array<i64: 2>, scalar_prefetch = 0 : i64, scratch_operands = 1 : i64, tpu.core_type = #tpu.core_type<tc>, window_params = [{transform_indices = @transform_0, window_bounds = array<i64: 1, 8, 32>}, {pipeline_mode = #tpu.pipeline_mode<synchronous>, transform_indices = @transform_1, window_bounds = array<i64: 8, 24>}, {pipeline_mode = #tpu.pipeline_mode<synchronous>, transform_indices = @transform_2, window_bounds = array<i64: 8, 1>}, {pipeline_mode = #tpu.pipeline_mode<synchronous>, transform_indices = @transform_3, window_bounds = array<i64: 8, 24>}, {pipeline_mode = #tpu.pipeline_mode<synchronous>, transform_indices = @transform_4, window_bounds = array<i64: 8, 1>}, {pipeline_mode = #tpu.pipeline_mode<synchronous>, transform_indices = @transform_5, window_bounds = array<i64: 8, 40>}, {pipeline_mode = #tpu.pipeline_mode<synchronous>, transform_indices = @transform_6, window_bounds = array<i64: 8, 1>}, {pipeline_mode = #tpu.pipeline_mode<synchronous>, transform_indices = @transform_7, window_bounds = array<i64: 8, 40>}, {pipeline_mode = #tpu.pipeline_mode<synchronous>, transform_indices = @transform_8, window_bounds = array<i64: 8, 1>}, {transform_indices = @transform_9, window_bounds = array<i64: 1, 8, 32>}]} {
    %c0 = arith.constant 0 : index
    %c0_0 = arith.constant 0 : index
    %c0_1 = arith.constant 0 : index
    %0 = vector.load %arg1[%c0, %c0_0, %c0_1] : memref<1x8x32xf32, #tpu.memory_space<vmem>>, vector<1x8x32xf32>
    %1 = vector.shape_cast %0 : vector<1x8x32xf32> to vector<8x32xf32>
    %c0_2 = arith.constant 0 : index
    %c0_3 = arith.constant 0 : index
    %2 = vector.load %arg2[%c0_2, %c0_3] : memref<8x24xf32, #tpu.memory_space<vmem>>, vector<8x24xf32>
    %c0_4 = arith.constant 0 : index
    %c0_5 = arith.constant 0 : index
    %3 = vector.load %arg3[%c0_4, %c0_5] : memref<8x1xf32, #tpu.memory_space<vmem>>, vector<8x1xf32>
    %cst = arith.constant 0.000000e+00 : f32
    %4 = vector.broadcast %cst : f32 to vector<8x32xf32>
    %5 = arith.cmpf oge, %1, %4 : vector<8x32xf32>
    %cst_6 = arith.constant 1.000000e-01 : f32
    %6 = vector.broadcast %cst_6 : f32 to vector<8x32xf32>
    %7 = arith.mulf %6, %1 : vector<8x32xf32>
    %8 = arith.select %5, %1, %7 : vector<8x32xi1>, vector<8x32xf32>
    %cst_7 = arith.constant 0.000000e+00 : f32
    %9 = vector.broadcast %cst_7 : f32 to vector<8x1xf32>
    %c0_8 = arith.constant 0 : index
    %c0_9 = arith.constant 0 : index
    %10 = vector.load %arg11[%c0_8, %c0_9] : memref<40x32xf32, #tpu.memory_space<vmem>>, vector<8x1xf32>
    tpu.vector_store %arg11[%c0_8, %c0_9], %9 {strides = array<i32>} : memref<40x32xf32, #tpu.memory_space<vmem>>, vector<8x1xf32>,
    %11 = vector.extract_strided_slice %8 {offsets = [0, 0], sizes = [8, 31], strides = [1, 1]} : vector<8x32xf32> to vector<8x31xf32>
    %c0_10 = arith.constant 0 : index
    %c1 = arith.constant 1 : index
    %12 = vector.load %arg11[%c0_10, %c1] : memref<40x32xf32, #tpu.memory_space<vmem>>, vector<8x31xf32>
    tpu.vector_store %arg11[%c0_10, %c1], %11 {strides = array<i32>} : memref<40x32xf32, #tpu.memory_space<vmem>>, vector<8x31xf32>,
    %c8 = arith.constant 8 : index
    %c0_11 = arith.constant 0 : index
    %13 = vector.load %arg11[%c8, %c0_11] : memref<40x32xf32, #tpu.memory_space<vmem>>, vector<8x32xf32>
    tpu.vector_store %arg11[%c8, %c0_11], %8 {strides = array<i32>} : memref<40x32xf32, #tpu.memory_space<vmem>>, vector<8x32xf32>,
    %cst_12 = arith.constant 0.000000e+00 : f32
    %14 = vector.broadcast %cst_12 : f32 to vector<8x1xf32>
    %c16 = arith.constant 16 : index
    %c31 = arith.constant 31 : index
    %15 = vector.load %arg11[%c16, %c31] : memref<40x32xf32, #tpu.memory_space<vmem>>, vector<8x1xf32>
    tpu.vector_store %arg11[%c16, %c31], %14 {strides = array<i32>} : memref<40x32xf32, #tpu.memory_space<vmem>>, vector<8x1xf32>,
    %16 = vector.extract_strided_slice %8 {offsets = [0, 1], sizes = [8, 31], strides = [1, 1]} : vector<8x32xf32> to vector<8x31xf32>
    %c16_13 = arith.constant 16 : index
    %c0_14 = arith.constant 0 : index
    %17 = vector.load %arg11[%c16_13, %c0_14] : memref<40x32xf32, #tpu.memory_space<vmem>>, vector<8x31xf32>
    tpu.vector_store %arg11[%c16_13, %c0_14], %16 {strides = array<i32>} : memref<40x32xf32, #tpu.memory_space<vmem>>, vector<8x31xf32>,
    %c0_15 = arith.constant 0 : index
    %c0_16 = arith.constant 0 : index
    %18 = vector.load %arg11[%c0_15, %c0_16] : memref<40x32xf32, #tpu.memory_space<vmem>>, vector<24x32xf32>
    %cst_17 = arith.constant dense<0.000000e+00> : vector<8x32xf32>
    %19 = tpu.matmul %2, %18, %cst_17 {dimension_numbers = #tpu.dot_dimension_numbers<[1], [0], [0], [1], [0, 0, 1, 1], [], []>} : vector<8x24xf32>, vector<24x32xf32>, vector<8x32xf32> -> vector<8x32xf32>
    %20 = vector.broadcast %3 : vector<8x1xf32> to vector<8x32xf32>
    %21 = arith.addf %19, %20 : vector<8x32xf32>
    %c0_18 = arith.constant 0 : index
    %c0_19 = arith.constant 0 : index
    %22 = vector.load %arg4[%c0_18, %c0_19] : memref<8x24xf32, #tpu.memory_space<vmem>>, vector<8x24xf32>
    %c0_20 = arith.constant 0 : index
    %c0_21 = arith.constant 0 : index
    %23 = vector.load %arg5[%c0_20, %c0_21] : memref<8x1xf32, #tpu.memory_space<vmem>>, vector<8x1xf32>
    %cst_22 = arith.constant 0.000000e+00 : f32
    %24 = vector.broadcast %cst_22 : f32 to vector<8x32xf32>
    %25 = arith.cmpf oge, %21, %24 : vector<8x32xf32>
    %cst_23 = arith.constant 1.000000e-01 : f32
    %26 = vector.broadcast %cst_23 : f32 to vector<8x32xf32>
    %27 = arith.mulf %26, %21 : vector<8x32xf32>
    %28 = arith.select %25, %21, %27 : vector<8x32xi1>, vector<8x32xf32>
    %cst_24 = arith.constant 0.000000e+00 : f32
    %29 = vector.broadcast %cst_24 : f32 to vector<8x2xf32>
    %c0_25 = arith.constant 0 : index
    %c0_26 = arith.constant 0 : index
    %30 = vector.load %arg11[%c0_25, %c0_26] : memref<40x32xf32, #tpu.memory_space<vmem>>, vector<8x2xf32>
    tpu.vector_store %arg11[%c0_25, %c0_26], %29 {strides = array<i32>} : memref<40x32xf32, #tpu.memory_space<vmem>>, vector<8x2xf32>,
    %31 = vector.extract_strided_slice %28 {offsets = [0, 0], sizes = [8, 30], strides = [1, 1]} : vector<8x32xf32> to vector<8x30xf32>
    %c0_27 = arith.constant 0 : index
    %c2 = arith.constant 2 : index
    %32 = vector.load %arg11[%c0_27, %c2] : memref<40x32xf32, #tpu.memory_space<vmem>>, vector<8x30xf32>
    tpu.vector_store %arg11[%c0_27, %c2], %31 {strides = array<i32>} : memref<40x32xf32, #tpu.memory_space<vmem>>, vector<8x30xf32>,
    %c8_28 = arith.constant 8 : index
    %c0_29 = arith.constant 0 : index
    %33 = vector.load %arg11[%c8_28, %c0_29] : memref<40x32xf32, #tpu.memory_space<vmem>>, vector<8x32xf32>
    tpu.vector_store %arg11[%c8_28, %c0_29], %28 {strides = array<i32>} : memref<40x32xf32, #tpu.memory_space<vmem>>, vector<8x32xf32>,
    %cst_30 = arith.constant 0.000000e+00 : f32
    %34 = vector.broadcast %cst_30 : f32 to vector<8x2xf32>
    %c16_31 = arith.constant 16 : index
    %c30 = arith.constant 30 : index
    %35 = vector.load %arg11[%c16_31, %c30] : memref<40x32xf32, #tpu.memory_space<vmem>>, vector<8x2xf32>
    tpu.vector_store %arg11[%c16_31, %c30], %34 {strides = array<i32>} : memref<40x32xf32, #tpu.memory_space<vmem>>, vector<8x2xf32>,
    %36 = vector.extract_strided_slice %28 {offsets = [0, 2], sizes = [8, 30], strides = [1, 1]} : vector<8x32xf32> to vector<8x30xf32>
    %c16_32 = arith.constant 16 : index
    %c0_33 = arith.constant 0 : index
    %37 = vector.load %arg11[%c16_32, %c0_33] : memref<40x32xf32, #tpu.memory_space<vmem>>, vector<8x30xf32>
    tpu.vector_store %arg11[%c16_32, %c0_33], %36 {strides = array<i32>} : memref<40x32xf32, #tpu.memory_space<vmem>>, vector<8x30xf32>,
    %c0_34 = arith.constant 0 : index
    %c0_35 = arith.constant 0 : index
    %38 = vector.load %arg11[%c0_34, %c0_35] : memref<40x32xf32, #tpu.memory_space<vmem>>, vector<24x32xf32>
    %cst_36 = arith.constant dense<0.000000e+00> : vector<8x32xf32>
    %39 = tpu.matmul %22, %38, %cst_36 {dimension_numbers = #tpu.dot_dimension_numbers<[1], [0], [0], [1], [0, 0, 1, 1], [], []>} : vector<8x24xf32>, vector<24x32xf32>, vector<8x32xf32> -> vector<8x32xf32>
    %40 = vector.broadcast %23 : vector<8x1xf32> to vector<8x32xf32>
    %41 = arith.addf %39, %40 : vector<8x32xf32>
    %42 = arith.addf %1, %41 : vector<8x32xf32>
    %c0_37 = arith.constant 0 : index
    %c0_38 = arith.constant 0 : index
    %43 = vector.load %arg6[%c0_37, %c0_38] : memref<8x40xf32, #tpu.memory_space<vmem>>, vector<8x40xf32>
    %c0_39 = arith.constant 0 : index
    %c0_40 = arith.constant 0 : index
    %44 = vector.load %arg7[%c0_39, %c0_40] : memref<8x1xf32, #tpu.memory_space<vmem>>, vector<8x1xf32>
    %cst_41 = arith.constant 0.000000e+00 : f32
    %45 = vector.broadcast %cst_41 : f32 to vector<8x32xf32>
    %46 = arith.cmpf oge, %1, %45 : vector<8x32xf32>
    %cst_42 = arith.constant 1.000000e-01 : f32
    %47 = vector.broadcast %cst_42 : f32 to vector<8x32xf32>
    %48 = arith.mulf %47, %1 : vector<8x32xf32>
    %49 = arith.select %46, %1, %48 : vector<8x32xi1>, vector<8x32xf32>
    %cst_43 = arith.constant 0.000000e+00 : f32
    %50 = vector.broadcast %cst_43 : f32 to vector<8x2xf32>
    %c0_44 = arith.constant 0 : index
    %c0_45 = arith.constant 0 : index
    %51 = vector.load %arg11[%c0_44, %c0_45] : memref<40x32xf32, #tpu.memory_space<vmem>>, vector<8x2xf32>
    tpu.vector_store %arg11[%c0_44, %c0_45], %50 {strides = array<i32>} : memref<40x32xf32, #tpu.memory_space<vmem>>, vector<8x2xf32>,
    %52 = vector.extract_strided_slice %49 {offsets = [0, 0], sizes = [8, 30], strides = [1, 1]} : vector<8x32xf32> to vector<8x30xf32>
    %c0_46 = arith.constant 0 : index
    %c2_47 = arith.constant 2 : index
    %53 = vector.load %arg11[%c0_46, %c2_47] : memref<40x32xf32, #tpu.memory_space<vmem>>, vector<8x30xf32>
    tpu.vector_store %arg11[%c0_46, %c2_47], %52 {strides = array<i32>} : memref<40x32xf32, #tpu.memory_space<vmem>>, vector<8x30xf32>,
    %cst_48 = arith.constant 0.000000e+00 : f32
    %54 = vector.broadcast %cst_48 : f32 to vector<8x1xf32>
    %c8_49 = arith.constant 8 : index
    %c0_50 = arith.constant 0 : index
    %55 = vector.load %arg11[%c8_49, %c0_50] : memref<40x32xf32, #tpu.memory_space<vmem>>, vector<8x1xf32>
    tpu.vector_store %arg11[%c8_49, %c0_50], %54 {strides = array<i32>} : memref<40x32xf32, #tpu.memory_space<vmem>>, vector<8x1xf32>,
    %56 = vector.extract_strided_slice %49 {offsets = [0, 0], sizes = [8, 31], strides = [1, 1]} : vector<8x32xf32> to vector<8x31xf32>
    %c8_51 = arith.constant 8 : index
    %c1_52 = arith.constant 1 : index
    %57 = vector.load %arg11[%c8_51, %c1_52] : memref<40x32xf32, #tpu.memory_space<vmem>>, vector<8x31xf32>
    tpu.vector_store %arg11[%c8_51, %c1_52], %56 {strides = array<i32>} : memref<40x32xf32, #tpu.memory_space<vmem>>, vector<8x31xf32>,
    %c16_53 = arith.constant 16 : index
    %c0_54 = arith.constant 0 : index
    %58 = vector.load %arg11[%c16_53, %c0_54] : memref<40x32xf32, #tpu.memory_space<vmem>>, vector<8x32xf32>
    tpu.vector_store %arg11[%c16_53, %c0_54], %49 {strides = array<i32>} : memref<40x32xf32, #tpu.memory_space<vmem>>, vector<8x32xf32>,
    %cst_55 = arith.constant 0.000000e+00 : f32
    %59 = vector.broadcast %cst_55 : f32 to vector<8x1xf32>
    %c24 = arith.constant 24 : index
    %c31_56 = arith.constant 31 : index
    %60 = vector.load %arg11[%c24, %c31_56] : memref<40x32xf32, #tpu.memory_space<vmem>>, vector<8x1xf32>
    tpu.vector_store %arg11[%c24, %c31_56], %59 {strides = array<i32>} : memref<40x32xf32, #tpu.memory_space<vmem>>, vector<8x1xf32>,
    %61 = vector.extract_strided_slice %49 {offsets = [0, 1], sizes = [8, 31], strides = [1, 1]} : vector<8x32xf32> to vector<8x31xf32>
    %c24_57 = arith.constant 24 : index
    %c0_58 = arith.constant 0 : index
    %62 = vector.load %arg11[%c24_57, %c0_58] : memref<40x32xf32, #tpu.memory_space<vmem>>, vector<8x31xf32>
    tpu.vector_store %arg11[%c24_57, %c0_58], %61 {strides = array<i32>} : memref<40x32xf32, #tpu.memory_space<vmem>>, vector<8x31xf32>,
    %cst_59 = arith.constant 0.000000e+00 : f32
    %63 = vector.broadcast %cst_59 : f32 to vector<8x2xf32>
    %c32 = arith.constant 32 : index
    %c30_60 = arith.constant 30 : index
    %64 = vector.load %arg11[%c32, %c30_60] : memref<40x32xf32, #tpu.memory_space<vmem>>, vector<8x2xf32>
    tpu.vector_store %arg11[%c32, %c30_60], %63 {strides = array<i32>} : memref<40x32xf32, #tpu.memory_space<vmem>>, vector<8x2xf32>,
    %65 = vector.extract_strided_slice %49 {offsets = [0, 2], sizes = [8, 30], strides = [1, 1]} : vector<8x32xf32> to vector<8x30xf32>
    %c32_61 = arith.constant 32 : index
    %c0_62 = arith.constant 0 : index
    %66 = vector.load %arg11[%c32_61, %c0_62] : memref<40x32xf32, #tpu.memory_space<vmem>>, vector<8x30xf32>
    tpu.vector_store %arg11[%c32_61, %c0_62], %65 {strides = array<i32>} : memref<40x32xf32, #tpu.memory_space<vmem>>, vector<8x30xf32>,
    %c0_63 = arith.constant 0 : index
    %c0_64 = arith.constant 0 : index
    %67 = vector.load %arg11[%c0_63, %c0_64] : memref<40x32xf32, #tpu.memory_space<vmem>>, vector<40x32xf32>
    %cst_65 = arith.constant dense<0.000000e+00> : vector<8x32xf32>
    %68 = tpu.matmul %43, %67, %cst_65 {dimension_numbers = #tpu.dot_dimension_numbers<[1], [0], [0], [1], [0, 0, 1, 1], [], []>} : vector<8x40xf32>, vector<40x32xf32>, vector<8x32xf32> -> vector<8x32xf32>
    %69 = vector.broadcast %44 : vector<8x1xf32> to vector<8x32xf32>
    %70 = arith.addf %68, %69 : vector<8x32xf32>
    %71 = arith.addf %1, %70 : vector<8x32xf32>
    %c0_66 = arith.constant 0 : index
    %c0_67 = arith.constant 0 : index
    %72 = vector.load %arg8[%c0_66, %c0_67] : memref<8x40xf32, #tpu.memory_space<vmem>>, vector<8x40xf32>
    %c0_68 = arith.constant 0 : index
    %c0_69 = arith.constant 0 : index
    %73 = vector.load %arg9[%c0_68, %c0_69] : memref<8x1xf32, #tpu.memory_space<vmem>>, vector<8x1xf32>
    %cst_70 = arith.constant 0.000000e+00 : f32
    %74 = vector.broadcast %cst_70 : f32 to vector<8x32xf32>
    %75 = arith.cmpf oge, %71, %74 : vector<8x32xf32>
    %cst_71 = arith.constant 1.000000e-01 : f32
    %76 = vector.broadcast %cst_71 : f32 to vector<8x32xf32>
    %77 = arith.mulf %76, %71 : vector<8x32xf32>
    %78 = arith.select %75, %71, %77 : vector<8x32xi1>, vector<8x32xf32>
    %cst_72 = arith.constant 0.000000e+00 : f32
    %79 = vector.broadcast %cst_72 : f32 to vector<8x6xf32>
    %c0_73 = arith.constant 0 : index
    %c0_74 = arith.constant 0 : index
    %80 = vector.load %arg11[%c0_73, %c0_74] : memref<40x32xf32, #tpu.memory_space<vmem>>, vector<8x6xf32>
    tpu.vector_store %arg11[%c0_73, %c0_74], %79 {strides = array<i32>} : memref<40x32xf32, #tpu.memory_space<vmem>>, vector<8x6xf32>,
    %81 = vector.extract_strided_slice %78 {offsets = [0, 0], sizes = [8, 26], strides = [1, 1]} : vector<8x32xf32> to vector<8x26xf32>
    %c0_75 = arith.constant 0 : index
    %c6 = arith.constant 6 : index
    %82 = vector.load %arg11[%c0_75, %c6] : memref<40x32xf32, #tpu.memory_space<vmem>>, vector<8x26xf32>
    tpu.vector_store %arg11[%c0_75, %c6], %81 {strides = array<i32>} : memref<40x32xf32, #tpu.memory_space<vmem>>, vector<8x26xf32>,
    %cst_76 = arith.constant 0.000000e+00 : f32
    %83 = vector.broadcast %cst_76 : f32 to vector<8x3xf32>
    %c8_77 = arith.constant 8 : index
    %c0_78 = arith.constant 0 : index
    %84 = vector.load %arg11[%c8_77, %c0_78] : memref<40x32xf32, #tpu.memory_space<vmem>>, vector<8x3xf32>
    tpu.vector_store %arg11[%c8_77, %c0_78], %83 {strides = array<i32>} : memref<40x32xf32, #tpu.memory_space<vmem>>, vector<8x3xf32>,
    %85 = vector.extract_strided_slice %78 {offsets = [0, 0], sizes = [8, 29], strides = [1, 1]} : vector<8x32xf32> to vector<8x29xf32>
    %c8_79 = arith.constant 8 : index
    %c3 = arith.constant 3 : index
    %86 = vector.load %arg11[%c8_79, %c3] : memref<40x32xf32, #tpu.memory_space<vmem>>, vector<8x29xf32>
    tpu.vector_store %arg11[%c8_79, %c3], %85 {strides = array<i32>} : memref<40x32xf32, #tpu.memory_space<vmem>>, vector<8x29xf32>,
    %c16_80 = arith.constant 16 : index
    %c0_81 = arith.constant 0 : index
    %87 = vector.load %arg11[%c16_80, %c0_81] : memref<40x32xf32, #tpu.memory_space<vmem>>, vector<8x32xf32>
    tpu.vector_store %arg11[%c16_80, %c0_81], %78 {strides = array<i32>} : memref<40x32xf32, #tpu.memory_space<vmem>>, vector<8x32xf32>,
    %cst_82 = arith.constant 0.000000e+00 : f32
    %88 = vector.broadcast %cst_82 : f32 to vector<8x3xf32>
    %c24_83 = arith.constant 24 : index
    %c29 = arith.constant 29 : index
    %89 = vector.load %arg11[%c24_83, %c29] : memref<40x32xf32, #tpu.memory_space<vmem>>, vector<8x3xf32>
    tpu.vector_store %arg11[%c24_83, %c29], %88 {strides = array<i32>} : memref<40x32xf32, #tpu.memory_space<vmem>>, vector<8x3xf32>,
    %90 = vector.extract_strided_slice %78 {offsets = [0, 3], sizes = [8, 29], strides = [1, 1]} : vector<8x32xf32> to vector<8x29xf32>
    %c24_84 = arith.constant 24 : index
    %c0_85 = arith.constant 0 : index
    %91 = vector.load %arg11[%c24_84, %c0_85] : memref<40x32xf32, #tpu.memory_space<vmem>>, vector<8x29xf32>
    tpu.vector_store %arg11[%c24_84, %c0_85], %90 {strides = array<i32>} : memref<40x32xf32, #tpu.memory_space<vmem>>, vector<8x29xf32>,
    %cst_86 = arith.constant 0.000000e+00 : f32
    %92 = vector.broadcast %cst_86 : f32 to vector<8x6xf32>
    %c32_87 = arith.constant 32 : index
    %c26 = arith.constant 26 : index
    %93 = vector.load %arg11[%c32_87, %c26] : memref<40x32xf32, #tpu.memory_space<vmem>>, vector<8x6xf32>
    tpu.vector_store %arg11[%c32_87, %c26], %92 {strides = array<i32>} : memref<40x32xf32, #tpu.memory_space<vmem>>, vector<8x6xf32>,
    %94 = vector.extract_strided_slice %78 {offsets = [0, 6], sizes = [8, 26], strides = [1, 1]} : vector<8x32xf32> to vector<8x26xf32>
    %c32_88 = arith.constant 32 : index
    %c0_89 = arith.constant 0 : index
    %95 = vector.load %arg11[%c32_88, %c0_89] : memref<40x32xf32, #tpu.memory_space<vmem>>, vector<8x26xf32>
    tpu.vector_store %arg11[%c32_88, %c0_89], %94 {strides = array<i32>} : memref<40x32xf32, #tpu.memory_space<vmem>>, vector<8x26xf32>,
    %c0_90 = arith.constant 0 : index
    %c0_91 = arith.constant 0 : index
    %96 = vector.load %arg11[%c0_90, %c0_91] : memref<40x32xf32, #tpu.memory_space<vmem>>, vector<40x32xf32>
    %cst_92 = arith.constant dense<0.000000e+00> : vector<8x32xf32>
    %97 = tpu.matmul %72, %96, %cst_92 {dimension_numbers = #tpu.dot_dimension_numbers<[1], [0], [0], [1], [0, 0, 1, 1], [], []>} : vector<8x40xf32>, vector<40x32xf32>, vector<8x32xf32> -> vector<8x32xf32>
    %98 = vector.broadcast %73 : vector<8x1xf32> to vector<8x32xf32>
    %99 = arith.addf %97, %98 : vector<8x32xf32>
    %100 = arith.addf %71, %99 : vector<8x32xf32>
    %101 = arith.addf %42, %100 : vector<8x32xf32>
    %cst_93 = arith.constant 5.000000e-01 : f32
    %102 = vector.broadcast %cst_93 : f32 to vector<8x32xf32>
    %103 = arith.mulf %101, %102 : vector<8x32xf32>
    %c0_94 = arith.constant 0 : index
    %c0_95 = arith.constant 0 : index
    %c0_96 = arith.constant 0 : index
    %104 = vector.load %arg10[%c0_94, %c0_95, %c0_96] : memref<1x8x32xf32, #tpu.memory_space<vmem>>, vector<1x8x32xf32>
    %105 = vector.shape_cast %104 : vector<1x8x32xf32> to vector<8x32xf32>
    %106 = vector.shape_cast %103 : vector<8x32xf32> to vector<1x8x32xf32>
    tpu.vector_store %arg10[%c0_94, %c0_95, %c0_96], %106 {strides = array<i32>} : memref<1x8x32xf32, #tpu.memory_space<vmem>>, vector<1x8x32xf32>,
    return
  }
  func.func @transform_0(%arg0: i32) -> (i32, i32, i32) {
    %c0_i32 = arith.constant 0 : i32
    %c0_i32_0 = arith.constant 0 : i32
    %c0_i32_1 = arith.constant 0 : i32
    return %arg0, %c0_i32, %c0_i32_0 : i32, i32, i32
  }
  func.func @transform_1(%arg0: i32) -> (i32, i32) {
    %c0_i32 = arith.constant 0 : i32
    %c0_i32_0 = arith.constant 0 : i32
    %c0_i32_1 = arith.constant 0 : i32
    return %c0_i32, %c0_i32_0 : i32, i32
  }
  func.func @transform_2(%arg0: i32) -> (i32, i32) {
    %c0_i32 = arith.constant 0 : i32
    %c0_i32_0 = arith.constant 0 : i32
    %c0_i32_1 = arith.constant 0 : i32
    return %c0_i32, %c0_i32_0 : i32, i32
  }
  func.func @transform_3(%arg0: i32) -> (i32, i32) {
    %c0_i32 = arith.constant 0 : i32
    %c0_i32_0 = arith.constant 0 : i32
    %c0_i32_1 = arith.constant 0 : i32
    return %c0_i32, %c0_i32_0 : i32, i32
  }
  func.func @transform_4(%arg0: i32) -> (i32, i32) {
    %c0_i32 = arith.constant 0 : i32
    %c0_i32_0 = arith.constant 0 : i32
    %c0_i32_1 = arith.constant 0 : i32
    return %c0_i32, %c0_i32_0 : i32, i32
  }
  func.func @transform_5(%arg0: i32) -> (i32, i32) {
    %c0_i32 = arith.constant 0 : i32
    %c0_i32_0 = arith.constant 0 : i32
    %c0_i32_1 = arith.constant 0 : i32
    return %c0_i32, %c0_i32_0 : i32, i32
  }
  func.func @transform_6(%arg0: i32) -> (i32, i32) {
    %c0_i32 = arith.constant 0 : i32
    %c0_i32_0 = arith.constant 0 : i32
    %c0_i32_1 = arith.constant 0 : i32
    return %c0_i32, %c0_i32_0 : i32, i32
  }
  func.func @transform_7(%arg0: i32) -> (i32, i32) {
    %c0_i32 = arith.constant 0 : i32
    %c0_i32_0 = arith.constant 0 : i32
    %c0_i32_1 = arith.constant 0 : i32
    return %c0_i32, %c0_i32_0 : i32, i32
  }
  func.func @transform_8(%arg0: i32) -> (i32, i32) {
    %c0_i32 = arith.constant 0 : i32
    %c0_i32_0 = arith.constant 0 : i32
    %c0_i32_1 = arith.constant 0 : i32
    return %c0_i32, %c0_i32_0 : i32, i32
  }
  func.func @transform_9(%arg0: i32) -> (i32, i32, i32) {
    %c0_i32 = arith.constant 0 : i32
    %c0_i32_0 = arith.constant 0 : i32
    %c0_i32_1 = arith.constant 0 : i32
    return %arg0, %c0_i32, %c0_i32_0 : i32, i32, i32
  }
}

</mosaic_0001>

<llo_original>
// kernel: _lambda_.5
$region0: #{_lambda_.5}
  #allocation0 [shape = 'u32[]', space=smem, size = 0x4, offset = 0x4, fixed_abs, tag = 'smem constant byte address 0x4 - core index']
  #allocation1 [shape = 'u32[144,128]{1,0:T(1,128)}', space=vmem, size = 0x12000, scoped, tag = 'internal scratch']
  #allocation2 [shape = 'f32[32,16]{1,0:T(8,128)}', space=vmem, size = 0x4000, scoped, tag = 'scratch operand']
  %s0 = inlined_call_operand.vmem [shape: f32[2,16,16], index: 0, kind: input, shape index: {}]
  %s1 = inlined_call_operand.vmem [shape: f32[8,32], index: 1, kind: input, shape index: {}]
  %s2 = inlined_call_operand.vmem [shape: f32[8,32], index: 2, kind: input, shape index: {}]
  %s3 = inlined_call_operand.vmem [shape: f32[8,1], index: 3, kind: input, shape index: {}]
  %s4 = inlined_call_operand.vmem [shape: f32[2,16,16], index: 4, kind: output, shape index: {}]
  %s5 = sld [smem:[#allocation0]]
  $region49: #{_lambda_.5} parent=0
    _
  %s7 = ssub.s32 1, %s5
  %s8 = scalar_select 0, %s7, %s5
  loop: start=0, step=1, limit=4
  $region2: #{_lambda_.5} parent=0 // loop_pre_header
    _
  $region3: #{_lambda_.5} parent=0 // loop_header
    %s10 = sphi 0, %s14
    %p11 = scmp.ge.s32.totalorder %s10, 4
    %s20 = sphi 0, %s22
    %s23 = sphi 0, %s20
    %s24 = sphi 0, %s23
    %s40 = sphi 0, %s24
    %s44 = sphi 0, %s44
    %s46 = sphi 0, %s44
    %s47 = sphi 0, %s46
    %s61 = sphi 0, %s47
    %s65 = sphi 0, %s65
    %s67 = sphi 0, %s65
    %s68 = sphi 0, %s67
    %s82 = sphi 0, %s68
    %s86 = sphi 0, %s86
    %s88 = sphi 0, %s86
    %s89 = sphi 0, %s88
    %s103 = sphi 0, %s89
    %s109 = sphi 0, %s111
    %s112 = sphi 0, %s109
    %s113 = sphi 0, %s112
    %s129 = sphi 0, %s113
  $region4: #{_lambda_.5} parent=0 // loop_header_branch
    %13 = sbr.rel (%p11) target = $region8
  $region5: #{_lambda_.5} parent=0 // loop_body
    %s15 = ssub.s32 %s10, 1
    %s16 = ssub.s32 %s10, 2
    %s17 = sadd.s32 %s10, 1
    %s18 = ssub.s32 %s10, %s17
    %p19 = scmp.eq.s32.totalorder %s18, 0
    %s21 = sadd.s32 %s20, 1
    %s22 = scalar_select %p19, %s20, %s21
    %p25 = pneg %p19
    %p26 = scmp.eq.s32.totalorder %s10, 1
    %p27 = por %p25, %p26
    %p28 = scmp.ne.s32.totalorder %s20, %s23
    %p29 = scmp.eq.s32.totalorder %s10, 0
    %p30 = por %p28, %p29
    %p31 = scmp.ne.s32.totalorder %s20, %s23
    %p32 = scmp.eq.s32.totalorder %s15, 1
    %p33 = por %p31, %p32
    %p34 = scmp.ne.s32.totalorder %s23, %s24
    %p35 = scmp.eq.s32.totalorder %s15, 0
    %p36 = por %p34, %p35
    %p37 = scmp.ne.s32.totalorder %s23, %s24
    %p38 = scmp.eq.s32.totalorder %s16, 1
    %p39 = por %p37, %p38
    %p41 = scmp.ne.s32.totalorder %s24, %s40
    %p42 = scmp.eq.s32.totalorder %s16, 0
    %p43 = por %p41, %p42
    %s45 = sadd.s32 %s44, 1
    %p48 = scmp.eq.s32.totalorder %s10, 1
    %p49 = scmp.ne.s32.totalorder %s44, %s46
    %p50 = scmp.eq.s32.totalorder %s10, 0
    %p51 = por %p49, %p50
    %p52 = scmp.ne.s32.totalorder %s44, %s46
    %p53 = scmp.eq.s32.totalorder %s15, 1
    %p54 = por %p52, %p53
    %p55 = scmp.ne.s32.totalorder %s46, %s47
    %p56 = scmp.eq.s32.totalorder %s15, 0
    %p57 = por %p55, %p56
    %p58 = scmp.ne.s32.totalorder %s46, %s47
    %p59 = scmp.eq.s32.totalorder %s16, 1
    %p60 = por %p58, %p59
    %p62 = scmp.ne.s32.totalorder %s47, %s61
    %p63 = scmp.eq.s32.totalorder %s16, 0
    %p64 = por %p62, %p63
    %s66 = sadd.s32 %s65, 1
    %p69 = scmp.eq.s32.totalorder %s10, 1
    %p70 = scmp.ne.s32.totalorder %s65, %s67
    %p71 = scmp.eq.s32.totalorder %s10, 0
    %p72 = por %p70, %p71
    %p73 = scmp.ne.s32.totalorder %s65, %s67
    %p74 = scmp.eq.s32.totalorder %s15, 1
    %p75 = por %p73, %p74
    %p76 = scmp.ne.s32.totalorder %s67, %s68
    %p77 = scmp.eq.s32.totalorder %s15, 0
    %p78 = por %p76, %p77
    %p79 = scmp.ne.s32.totalorder %s67, %s68
    %p80 = scmp.eq.s32.totalorder %s16, 1
    %p81 = por %p79, %p80
    %p83 = scmp.ne.s32.totalorder %s68, %s82
    %p84 = scmp.eq.s32.totalorder %s16, 0
    %p85 = por %p83, %p84
    %s87 = sadd.s32 %s86, 1
    %p90 = scmp.eq.s32.totalorder %s10, 1
    %p91 = scmp.ne.s32.totalorder %s86, %s88
    %p92 = scmp.eq.s32.totalorder %s10, 0
    %p93 = por %p91, %p92
    %p94 = scmp.ne.s32.totalorder %s86, %s88
    %p95 = scmp.eq.s32.totalorder %s15, 1
    %p96 = por %p94, %p95
    %p97 = scmp.ne.s32.totalorder %s88, %s89
    %p98 = scmp.eq.s32.totalorder %s15, 0
    %p99 = por %p97, %p98
    %p100 = scmp.ne.s32.totalorder %s88, %s89
    %p101 = scmp.eq.s32.totalorder %s16, 1
    %p102 = por %p100, %p101
    %p104 = scmp.ne.s32.totalorder %s89, %s103
    %p105 = scmp.eq.s32.totalorder %s16, 0
    %p106 = por %p104, %p105
    %s107 = ssub.s32 %s10, %s17
    %p108 = scmp.eq.s32.totalorder %s107, 0
    %s110 = sadd.s32 %s109, 1
    %s111 = scalar_select %p108, %s109, %s110
    %p114 = pneg %p108
    %p115 = scmp.eq.s32.totalorder %s10, 1
    %p116 = por %p114, %p115
    %p117 = scmp.ne.s32.totalorder %s109, %s112
    %p118 = scmp.eq.s32.totalorder %s10, 0
    %p119 = por %p117, %p118
    %p120 = scmp.ne.s32.totalorder %s109, %s112
    %p121 = scmp.eq.s32.totalorder %s15, 1
    %p122 = por %p120, %p121
    %p123 = scmp.ne.s32.totalorder %s112, %s113
    %p124 = scmp.eq.s32.totalorder %s15, 0
    %p125 = por %p123, %p124
    %p126 = scmp.ne.s32.totalorder %s112, %s113
    %p127 = scmp.eq.s32.totalorder %s16, 1
    %p128 = por %p126, %p127
    %p130 = scmp.ne.s32.totalorder %s113, %s129
    %p131 = scmp.eq.s32.totalorder %s16, 0
    %p132 = por %p130, %p131
    %p133 = scmp.le.s32.totalorder 1, %s10
    %p134 = scmp.lt.s32.totalorder %s10, 3
    %p135 = pnand %p133, %p134
    %p136 = pneg %p135
    // Predicated region
    $region9: #{_lambda_.5} parent=5 // pred_check
      _
    $region10: #{_lambda_.5} parent=5 // pred_check_branch
      %138 = sbr.rel (%p135) target = $region12
    $region11: #{_lambda_.5} parent=5 // pred_region
      %s139 = ssub.s32 %s10, 1
      // Predicated region
      $region13: #{_lambda_.5} parent=11 // pred_check
        %p140 = pneg %p57
      $region14: #{_lambda_.5} parent=11 // pred_check_branch
        %142 = sbr.rel (%p140) target = $region16
      $region15: #{_lambda_.5} parent=11 // pred_region
        _
      $region16: #{_lambda_.5} parent=11 // pred_fallthru
        _
      // Predicated region
      $region17: #{_lambda_.5} parent=11 // pred_check
        %p143 = pneg %p78
      $region18: #{_lambda_.5} parent=11 // pred_check_branch
        %145 = sbr.rel (%p143) target = $region20
      $region19: #{_lambda_.5} parent=11 // pred_region
        _
      $region20: #{_lambda_.5} parent=11 // pred_fallthru
        _
      // Predicated region
      $region21: #{_lambda_.5} parent=11 // pred_check
        %p146 = pneg %p99
      $region22: #{_lambda_.5} parent=11 // pred_check_branch
        %148 = sbr.rel (%p146) target = $region24
      $region23: #{_lambda_.5} parent=11 // pred_region
        _
      $region24: #{_lambda_.5} parent=11 // pred_fallthru
        _
    $region12: #{_lambda_.5} parent=5 // pred_fallthru
      _
    %p149 = scmp.lt.s32.totalorder %s10, 2
    // Predicated region
    $region25: #{_lambda_.5} parent=5 // pred_check
      %p150 = pneg %p149
    $region26: #{_lambda_.5} parent=5 // pred_check_branch
      %152 = sbr.rel (%p150) target = $region28
    $region27: #{_lambda_.5} parent=5 // pred_region
      // Predicated region
      $region29: #{_lambda_.5} parent=27 // pred_check
        %p153 = pneg %p30
      $region30: #{_lambda_.5} parent=27 // pred_check_branch
        %155 = sbr.rel (%p153) target = $region32
      $region31: #{_lambda_.5} parent=27 // pred_region
        %p156 = scmp.lt.s32.totalorder %s10, 1
        %s157 = scalar_select %p156, %s10, 1
        %s158 = smul.addr %s157, 2
        %s159 = smul.addr %s158, 8
        %s160 = scalar_lea.vmem %s0, %s159
      $region32: #{_lambda_.5} parent=27 // pred_fallthru
        _
    $region28: #{_lambda_.5} parent=5 // pred_fallthru
      _
    %p161 = scmp.le.s32.totalorder 1, %s10
    %p162 = scmp.lt.s32.totalorder %s10, 3
    %p163 = pnand %p161, %p162
    %p164 = pneg %p163
    // Predicated region
    $region33: #{_lambda_.5} parent=5 // pred_check
      _
    $region34: #{_lambda_.5} parent=5 // pred_check_branch
      %166 = sbr.rel (%p163) target = $region36
    $region35: #{_lambda_.5} parent=5 // pred_region
      %s167 = ssub.s32 %s10, 1
      %p168 = scmp.lt.s32.totalorder %s15, 1
      %s169 = scalar_select %p168, %s15, 1
      %s170 = smul.addr %s169, 2
      %s171 = smul.addr %s170, 8
      %s172 = scalar_lea.vmem %s0, %s171
      %p173 = pneg %p36
      %p174 = pneg %p33
      %p175 = pneg %p57
      %p176 = pneg %p54
      %p177 = pneg %p78
      %p178 = pneg %p75
      %p179 = pneg %p99
      %p180 = pneg %p96
      %p181 = pneg %p125
      %p182 = pneg %p122
      %p183 = scmp.lt.s32.totalorder %s15, 1
      %s184 = scalar_select %p183, %s15, 1
      %s185 = smul.addr %s184, 2
      %s186 = smul.addr %s185, 8
      %s187 = scalar_lea.vmem %s4, %s186
      %p188 = scmp.lt.s32.totalorder %s15, 1
      %s189 = scalar_select %p188, %s15, 1
      %s190 = smul.addr %s189, 2
      %s191 = smul.addr %s190, 8
      %s192 = scalar_lea.vmem %s0, %s191
      %p193 = scmp.lt.s32.totalorder %s15, 1
      %s194 = scalar_select %p193, %s15, 1
      %s195 = smul.addr %s194, 2
      %s196 = smul.addr %s195, 8
      %s197 = scalar_lea.vmem %s4, %s196
      %v198 = vld [vmem:[%s192] sm:$0xff]
      %v199 = vld [vmem:[%s192 + $0x8] sm:$0xff]
      %vm200 = vcmp.ge.f32.partialorder %v198, 0.0
      %vm201 = vcmp.ge.f32.partialorder %v199, 0.0
      %v202 = vmul.f32 %v198, 0.1
      %v203 = vmul.f32 %v199, 0.1
      %v204 = vsel %vm200, %v198, %v202
      %v205 = vsel %vm201, %v199, %v203
      %v206 = vld [vmem:[%s3] sm:$0xff]
      %v207 = vld [vmem:[%s1] sm:$0xff]
      %vm208 = vcmask 130048
      %209 = vst.msk [vmem:[#allocation2] sm:$0xff] %vm208, %v204
      %210 = vst.msk [vmem:[#allocation2 + $0x8] sm:$0xff] %vm208, %v205
      %vm211 = vcmask 7168
      %212 = vst.msk [vmem:[#allocation2 + $0x10] sm:$0xff] %vm211, 0.0
      %213 = vst.msk [vmem:[#allocation2 + $0x18] sm:$0xff] %vm211, 0.0
      %216 = vrot.lane.b32.xlu0 %v204, 1
      %v217 = vpop.permute.xlu0 %216
      %218 = vrot.lane.b32.xlu0 %v205, 1
      %v219 = vpop.permute.xlu0 %218
      %vm222 = vcmask 130056
      %223 = vst.msk [vmem:[#allocation2 + $0x10] sm:$0xff] %vm222, %v217
      %224 = vst.msk [vmem:[#allocation2 + $0x18] sm:$0xff] %vm222, %v219
      %v225 = vld [vmem:[#allocation2] sm:$0xff]
      %v226 = vld [vmem:[#allocation2 + $0x8] sm:$0xff]
      %v227 = vld [vmem:[#allocation2 + $0x10] sm:$0xff]
      %v228 = vld [vmem:[#allocation2 + $0x18] sm:$0xff]
      %230 = vset.pattern.permute.xlu0 0
      %231 = vperm.xlu0 %230, %v206
      %v232 = vpop.permute.xlu0 %231
      %vm234 = vcmask 261120
      %v236 = vsel %vm234, %v207, 0
      %238 = vmatprep.subr.mxu0 0.0
      %239 = vmatpush1.msra.mxu0 %v225
      %240 = vmatprep.subr.mxu0 0.0
      %241 = vmatpush1.msra.mxu0 %v226
      %242 = vmatprep.subr.mxu0 0.0
      %243 = vmatpush1.msra.mxu0 %v227
      %244 = vmatprep.subr.mxu0 0.0
      %245 = vmatpush1.msra.mxu0 %v228
      %246 = vmatprep.subr.mxu0 0.0
      %247 = vmatpush1.msra.mxu0 0.0
      %248 = vmatprep.subr.mxu0 0.0
      %249 = vmatpush1.msra.mxu0 0.0
      %250 = vmatprep.subr.mxu0 0.0
      %251 = vmatpush1.msra.mxu0 0.0
      %252 = vmatprep.subr.mxu0 0.0
      %253 = vmatpush1.msra.mxu0 0.0
      %254 = vmatprep.subr.mxu0 0.0
      %255 = vmatpush1.msra.mxu0 0.0
      %256 = vmatprep.subr.mxu0 0.0
      %257 = vmatpush1.msra.mxu0 0.0
      %258 = vmatprep.subr.mxu0 0.0
      %259 = vmatpush1.msra.mxu0 0.0
      %260 = vmatprep.subr.mxu0 0.0
      %261 = vmatpush1.msra.mxu0 0.0
      %262 = vmatprep.subr.mxu0 0.0
      %263 = vmatpush1.msra.mxu0 0.0
      %264 = vmatprep.subr.mxu0 0.0
      %265 = vmatpush1.msra.mxu0 0.0
      %266 = vmatprep.subr.mxu0 0.0
      %267 = vmatpush1.msra.mxu0 0.0
      %268 = vmatprep.subr.mxu0 0.0
      %269 = vmatpush1.msra.mxu0 0.0
      %270 = vmatprep.subr.mxu0 0.0
      %271 = vmatpush1.msra.mxu0 0.0
      %272 = vmatprep.subr.mxu0 0.0
      %273 = vmatpush1.msra.mxu0 0.0
      %274 = vmatprep.subr.mxu0 0.0
      %275 = vmatpush1.msra.mxu0 0.0
      %276 = vmatprep.subr.mxu0 0.0
      %277 = vmatpush1.msra.mxu0 0.0
      %278 = vmatprep.subr.mxu0 0.0
      %279 = vmatpush1.msra.mxu0 0.0
      %280 = vmatprep.subr.mxu0 0.0
      %281 = vmatpush1.msra.mxu0 0.0
      %282 = vmatprep.subr.mxu0 0.0
      %283 = vmatpush1.msra.mxu0 0.0
      %284 = vmatprep.subr.mxu0 0.0
      %285 = vmatpush1.msra.mxu0 0.0
      %286 = vmatprep.subr.mxu0 0.0
      %287 = vmatpush1.msra.mxu0 0.0
      %288 = vmatprep.subr.mxu0 0.0
      %289 = vmatpush1.msra.mxu0 0.0
      %290 = vmatprep.subr.mxu0 0.0
      %291 = vmatpush1.msra.mxu0 0.0
      %292 = vmatprep.subr.mxu0 0.0
      %293 = vmatpush1.msra.mxu0 0.0
      %294 = vmatprep.subr.mxu0 0.0
      %295 = vmatpush1.msra.mxu0 0.0
      %296 = vmatprep.subr.mxu0 0.0
      %297 = vmatpush1.msra.mxu0 0.0
      %298 = vmatprep.subr.mxu0 0.0
      %299 = vmatpush1.msra.mxu0 0.0
      %300 = vmatprep.subr.mxu0 0.0
      %301 = vmatpush1.msra.mxu0 0.0
      %302 = vmatprep.mubr.f32.mxu0 0.0
      %303 = vmatmul.mubr.f32.gmra.mrb[0].mxu0 %v236
      %v304 = vpop.f32.mrb[0].mxu0
      %v305 = vadd.f32 %v232, %v304
      %v306 = vpop.f32.mrb[0].mxu0
      %307 = vdwg.mxu0
      %308 = vst.msk [vmem:[%s197] sm:$0xff] %vm208, %v305
      %v309 = vld [vmem:[%s2] sm:$0xff]
      %vm310 = vcmask 130168
      %311 = vst.msk [vmem:[#allocation2] sm:$0xff] %vm310, 0.0
      %312 = vst.msk [vmem:[#allocation2 + $0x8] sm:$0xff] %vm310, 0.0
      %313 = vrot.lane.b32.xlu0 %v204, 127
      %v314 = vpop.permute.xlu0 %313
      %315 = vrot.lane.b32.xlu0 %v205, 127
      %v316 = vpop.permute.xlu0 %315
      %vm319 = vcmask 121856
      %320 = vst.msk [vmem:[#allocation2] sm:$0xff] %vm319, %v314
      %321 = vst.msk [vmem:[#allocation2 + $0x8] sm:$0xff] %vm319, %v316
      %322 = vst.msk [vmem:[#allocation2 + $0x10] sm:$0xff] %vm208, %v204
      %323 = vst.msk [vmem:[#allocation2 + $0x18] sm:$0xff] %vm208, %v205
      %v324 = vld [vmem:[#allocation2] sm:$0xff]
      %v325 = vld [vmem:[#allocation2 + $0x8] sm:$0xff]
      %v326 = vld [vmem:[#allocation2 + $0x10] sm:$0xff]
      %v327 = vld [vmem:[#allocation2 + $0x18] sm:$0xff]
      %v329 = vsel %vm234, %v309, 0
      %331 = vmatprep.subr.mxu0 0.0
      %332 = vmatpush1.msra.mxu0 %v324
      %333 = vmatprep.subr.mxu0 0.0
      %334 = vmatpush1.msra.mxu0 %v325
      %335 = vmatprep.subr.mxu0 0.0
      %336 = vmatpush1.msra.mxu0 %v326
      %337 = vmatprep.subr.mxu0 0.0
      %338 = vmatpush1.msra.mxu0 %v327
      %339 = vmatprep.subr.mxu0 0.0
      %340 = vmatpush1.msra.mxu0 0.0
      %341 = vmatprep.subr.mxu0 0.0
      %342 = vmatpush1.msra.mxu0 0.0
      %343 = vmatprep.subr.mxu0 0.0
      %344 = vmatpush1.msra.mxu0 0.0
      %345 = vmatprep.subr.mxu0 0.0
      %346 = vmatpush1.msra.mxu0 0.0
      %347 = vmatprep.subr.mxu0 0.0
      %348 = vmatpush1.msra.mxu0 0.0
      %349 = vmatprep.subr.mxu0 0.0
      %350 = vmatpush1.msra.mxu0 0.0
      %351 = vmatprep.subr.mxu0 0.0
      %352 = vmatpush1.msra.mxu0 0.0
      %353 = vmatprep.subr.mxu0 0.0
      %354 = vmatpush1.msra.mxu0 0.0
      %355 = vmatprep.subr.mxu0 0.0
      %356 = vmatpush1.msra.mxu0 0.0
      %357 = vmatprep.subr.mxu0 0.0
      %358 = vmatpush1.msra.mxu0 0.0
      %359 = vmatprep.subr.mxu0 0.0
      %360 = vmatpush1.msra.mxu0 0.0
      %361 = vmatprep.subr.mxu0 0.0
      %362 = vmatpush1.msra.mxu0 0.0
      %363 = vmatprep.subr.mxu0 0.0
      %364 = vmatpush1.msra.mxu0 0.0
      %365 = vmatprep.subr.mxu0 0.0
      %366 = vmatpush1.msra.mxu0 0.0
      %367 = vmatprep.subr.mxu0 0.0
      %368 = vmatpush1.msra.mxu0 0.0
      %369 = vmatprep.subr.mxu0 0.0
      %370 = vmatpush1.msra.mxu0 0.0
      %371 = vmatprep.subr.mxu0 0.0
      %372 = vmatpush1.msra.mxu0 0.0
      %373 = vmatprep.subr.mxu0 0.0
      %374 = vmatpush1.msra.mxu0 0.0
      %375 = vmatprep.subr.mxu0 0.0
      %376 = vmatpush1.msra.mxu0 0.0
      %377 = vmatprep.subr.mxu0 0.0
      %378 = vmatpush1.msra.mxu0 0.0
      %379 = vmatprep.subr.mxu0 0.0
      %380 = vmatpush1.msra.mxu0 0.0
      %381 = vmatprep.subr.mxu0 0.0
      %382 = vmatpush1.msra.mxu0 0.0
      %383 = vmatprep.subr.mxu0 0.0
      %384 = vmatpush1.msra.mxu0 0.0
      %385 = vmatprep.subr.mxu0 0.0
      %386 = vmatpush1.msra.mxu0 0.0
      %387 = vmatprep.subr.mxu0 0.0
      %388 = vmatpush1.msra.mxu0 0.0
      %389 = vmatprep.subr.mxu0 0.0
      %390 = vmatpush1.msra.mxu0 0.0
      %391 = vmatprep.subr.mxu0 0.0
      %392 = vmatpush1.msra.mxu0 0.0
      %393 = vmatprep.subr.mxu0 0.0
      %394 = vmatpush1.msra.mxu0 0.0
      %395 = vmatprep.mubr.f32.mxu0 0.0
      %396 = vmatmul.mubr.f32.gmra.mrb[0].mxu0 %v329
      %v397 = vpop.f32.mrb[0].mxu0
      %v398 = vadd.f32 %v232, %v397
      %v399 = vpop.f32.mrb[0].mxu0
      %400 = vdwg.mxu0
      %401 = vst.msk [vmem:[%s197 + $0x8] sm:$0xff] %vm208, %v398
      %p402 = scmp.lt.s32.totalorder %s15, 1
      %s403 = scalar_select %p402, %s15, 1
      %s404 = smul.addr %s403, 2
      %s405 = smul.addr %s404, 8
      %s406 = scalar_lea.vmem %s4, %s405
      // Predicated region
      $region37: #{_lambda_.5} parent=35 // pred_check
        %p407 = pneg %p122
      $region38: #{_lambda_.5} parent=35 // pred_check_branch
        %409 = sbr.rel (%p407) target = $region40
      $region39: #{_lambda_.5} parent=35 // pred_region
        _
      $region40: #{_lambda_.5} parent=35 // pred_fallthru
        _
    $region36: #{_lambda_.5} parent=5 // pred_fallthru
      _
    %p410 = scmp.le.s32.totalorder 2, %s10
    // Predicated region
    $region41: #{_lambda_.5} parent=5 // pred_check
      %p411 = pneg %p410
    $region42: #{_lambda_.5} parent=5 // pred_check_branch
      %413 = sbr.rel (%p411) target = $region44
    $region43: #{_lambda_.5} parent=5 // pred_region
      %s414 = ssub.s32 %s10, 2
      // Predicated region
      $region45: #{_lambda_.5} parent=43 // pred_check
        %p415 = pneg %p128
      $region46: #{_lambda_.5} parent=43 // pred_check_branch
        %417 = sbr.rel (%p415) target = $region48
      $region47: #{_lambda_.5} parent=43 // pred_region
        %p418 = scmp.lt.s32.totalorder %s16, 1
        %s419 = scalar_select %p418, %s16, 1
        %s420 = smul.addr %s419, 2
        %s421 = smul.addr %s420, 8
        %s422 = scalar_lea.vmem %s4, %s421
      $region48: #{_lambda_.5} parent=43 // pred_fallthru
        _
    $region44: #{_lambda_.5} parent=5 // pred_fallthru
      _
  $region6: #{_lambda_.5} parent=0 // loop_footer
    %s14 = sadd.s32 1, %s10
  $region7: #{_lambda_.5} parent=0 // loop_footer_branch
    %9 = sbr.rel target = $region3
  $region8: #{_lambda_.5} parent=0 // loop_exit
    _

// kernel: _lambda_.4
$region0: #{_lambda_.4}
  #allocation0 [shape = 'u32[]', space=smem, size = 0x4, offset = 0x4, fixed_abs, tag = 'smem constant byte address 0x4 - core index']
  #allocation1 [shape = 'u32[144,128]{1,0:T(1,128)}', space=vmem, size = 0x12000, scoped, tag = 'internal scratch']
  #allocation2 [shape = 'f32[56,16]{1,0:T(8,128)}', space=vmem, size = 0x7000, scoped, tag = 'scratch operand']
  %s0 = inlined_call_operand.hbm [shape: f32[2,8,16], index: 0, kind: input, shape index: {}]
  %s1 = inlined_call_operand.vmem [shape: f32[16,56], index: 1, kind: input, shape index: {}]
  %s2 = inlined_call_operand.vmem [shape: f32[16,1], index: 2, kind: input, shape index: {}]
  %s3 = inlined_call_operand.vmem [shape: f32[2,16,16], index: 3, kind: output, shape index: {}]
  %s4 = sld [smem:[#allocation0]]
  $region49: #{_lambda_.4} parent=0
    _
  %s6 = ssub.s32 1, %s4
  %s7 = scalar_select 0, %s6, %s4
  $region1: #{_lambda_.4} parent=0
    #allocation3 [shape = 'u8[8192]{0}', space=vmem, size = 0x2000, scoped, tag = 'input window, operand 0']
    #allocation4 [shape = 's32[2]{0}', space=sflag, size = 0x8, scoped, tag = 'scoped memory for _lambda_.4']
    %8 = vsyncpa [#allocation4], 0
    %s9 = scalar_lea.sflag [#allocation4], 1
    %10 = vsyncpa %s9, 0
    loop: start=0, step=1, limit=4
    $region2: #{_lambda_.4} parent=1 // loop_pre_header
      _
    $region3: #{_lambda_.4} parent=1 // loop_header
      %s12 = sphi 0, %s16
      %p13 = scmp.ge.s32.totalorder %s12, 4
      %s22 = sphi 0, %s24
      %s25 = sphi 0, %s22
      %s26 = sphi 0, %s25
      %s42 = sphi 0, %s26
      %s46 = sphi 0, %s46
      %s48 = sphi 0, %s46
      %s49 = sphi 0, %s48
      %s63 = sphi 0, %s49
      %s67 = sphi 0, %s67
      %s69 = sphi 0, %s67
      %s70 = sphi 0, %s69
      %s84 = sphi 0, %s70
      %s90 = sphi 0, %s92
      %s93 = sphi 0, %s90
      %s94 = sphi 0, %s93
      %s110 = sphi 0, %s94
    $region4: #{_lambda_.4} parent=1 // loop_header_branch
      %15 = sbr.rel (%p13) target = $region8
    $region5: #{_lambda_.4} parent=1 // loop_body
      %s17 = ssub.s32 %s12, 1
      %s18 = ssub.s32 %s12, 2
      %s19 = sadd.s32 %s12, 1
      %s20 = ssub.s32 %s12, %s19
      %p21 = scmp.eq.s32.totalorder %s20, 0
      %s23 = sadd.s32 %s22, 1
      %s24 = scalar_select %p21, %s22, %s23
      %p27 = pneg %p21
      %p28 = scmp.eq.s32.totalorder %s12, 1
      %p29 = por %p27, %p28
      %p30 = scmp.ne.s32.totalorder %s22, %s25
      %p31 = scmp.eq.s32.totalorder %s12, 0
      %p32 = por %p30, %p31
      %p33 = scmp.ne.s32.totalorder %s22, %s25
      %p34 = scmp.eq.s32.totalorder %s17, 1
      %p35 = por %p33, %p34
      %p36 = scmp.ne.s32.totalorder %s25, %s26
      %p37 = scmp.eq.s32.totalorder %s17, 0
      %p38 = por %p36, %p37
      %p39 = scmp.ne.s32.totalorder %s25, %s26
      %p40 = scmp.eq.s32.totalorder %s18, 1
      %p41 = por %p39, %p40
      %p43 = scmp.ne.s32.totalorder %s26, %s42
      %p44 = scmp.eq.s32.totalorder %s18, 0
      %p45 = por %p43, %p44
      %s47 = sadd.s32 %s46, 1
      %p50 = scmp.eq.s32.totalorder %s12, 1
      %p51 = scmp.ne.s32.totalorder %s46, %s48
      %p52 = scmp.eq.s32.totalorder %s12, 0
      %p53 = por %p51, %p52
      %p54 = scmp.ne.s32.totalorder %s46, %s48
      %p55 = scmp.eq.s32.totalorder %s17, 1
      %p56 = por %p54, %p55
      %p57 = scmp.ne.s32.totalorder %s48, %s49
      %p58 = scmp.eq.s32.totalorder %s17, 0
      %p59 = por %p57, %p58
      %p60 = scmp.ne.s32.totalorder %s48, %s49
      %p61 = scmp.eq.s32.totalorder %s18, 1
      %p62 = por %p60, %p61
      %p64 = scmp.ne.s32.totalorder %s49, %s63
      %p65 = scmp.eq.s32.totalorder %s18, 0
      %p66 = por %p64, %p65
      %s68 = sadd.s32 %s67, 1
      %p71 = scmp.eq.s32.totalorder %s12, 1
      %p72 = scmp.ne.s32.totalorder %s67, %s69
      %p73 = scmp.eq.s32.totalorder %s12, 0
      %p74 = por %p72, %p73
      %p75 = scmp.ne.s32.totalorder %s67, %s69
      %p76 = scmp.eq.s32.totalorder %s17, 1
      %p77 = por %p75, %p76
      %p78 = scmp.ne.s32.totalorder %s69, %s70
      %p79 = scmp.eq.s32.totalorder %s17, 0
      %p80 = por %p78, %p79
      %p81 = scmp.ne.s32.totalorder %s69, %s70
      %p82 = scmp.eq.s32.totalorder %s18, 1
      %p83 = por %p81, %p82
      %p85 = scmp.ne.s32.totalorder %s70, %s84
      %p86 = scmp.eq.s32.totalorder %s18, 0
      %p87 = por %p85, %p86
      %s88 = ssub.s32 %s12, %s19
      %p89 = scmp.eq.s32.totalorder %s88, 0
      %s91 = sadd.s32 %s90, 1
      %s92 = scalar_select %p89, %s90, %s91
      %p95 = pneg %p89
      %p96 = scmp.eq.s32.totalorder %s12, 1
      %p97 = por %p95, %p96
      %p98 = scmp.ne.s32.totalorder %s90, %s93
      %p99 = scmp.eq.s32.totalorder %s12, 0
      %p100 = por %p98, %p99
      %p101 = scmp.ne.s32.totalorder %s90, %s93
      %p102 = scmp.eq.s32.totalorder %s17, 1
      %p103 = por %p101, %p102
      %p104 = scmp.ne.s32.totalorder %s93, %s94
      %p105 = scmp.eq.s32.totalorder %s17, 0
      %p106 = por %p104, %p105
      %p107 = scmp.ne.s32.totalorder %s93, %s94
      %p108 = scmp.eq.s32.totalorder %s18, 1
      %p109 = por %p107, %p108
      %p111 = scmp.ne.s32.totalorder %s94, %s110
      %p112 = scmp.eq.s32.totalorder %s18, 0
      %p113 = por %p111, %p112
      %p114 = scmp.le.s32.totalorder 1, %s12
      %p115 = scmp.lt.s32.totalorder %s12, 3
      %p116 = pnand %p114, %p115
      %p117 = pneg %p116
      // Predicated region
      $region9: #{_lambda_.4} parent=5 // pred_check
        _
      $region10: #{_lambda_.4} parent=5 // pred_check_branch
        %119 = sbr.rel (%p116) target = $region12
      $region11: #{_lambda_.4} parent=5 // pred_region
        %s120 = ssub.s32 %s12, 1
        // Predicated region
        $region13: #{_lambda_.4} parent=11 // pred_check
          %p121 = pneg %p59
        $region14: #{_lambda_.4} parent=11 // pred_check_branch
          %123 = sbr.rel (%p121) target = $region16
        $region15: #{_lambda_.4} parent=11 // pred_region
          _
        $region16: #{_lambda_.4} parent=11 // pred_fallthru
          _
        // Predicated region
        $region17: #{_lambda_.4} parent=11 // pred_check
          %p124 = pneg %p80
        $region18: #{_lambda_.4} parent=11 // pred_check_branch
          %126 = sbr.rel (%p124) target = $region20
        $region19: #{_lambda_.4} parent=11 // pred_region
          _
        $region20: #{_lambda_.4} parent=11 // pred_fallthru
          _
      $region12: #{_lambda_.4} parent=5 // pred_fallthru
        _
      %p127 = scmp.lt.s32.totalorder %s12, 2
      // Predicated region
      $region21: #{_lambda_.4} parent=5 // pred_check
        %p128 = pneg %p127
      $region22: #{_lambda_.4} parent=5 // pred_check_branch
        %130 = sbr.rel (%p128) target = $region24
      $region23: #{_lambda_.4} parent=5 // pred_region
        // Predicated region
        $region25: #{_lambda_.4} parent=23 // pred_check
          %p131 = pneg %p32
        $region26: #{_lambda_.4} parent=23 // pred_check_branch
          %133 = sbr.rel (%p131) target = $region28
        $region27: #{_lambda_.4} parent=23 // pred_region
          %s134 = sand.u32 %s22, 1
          %s135 = scalar_lea.sflag [#allocation4], %s134
          %s136 = sand.u32 %s22, 1
          %s137 = smul.addr %s136, 8
          %s138 = scalar_lea.vmem [#allocation3], %s137
          %s140 = ssub.s32 128, 128
          %141 = vsyncadd %s135, %s140
          %s142 = smul.addr %s12, 128
          %s143 = scalar_lea.hbm %s0, %s142
          %s145 = sshll.u32 %s138, 4
          %s146 = int_to_ptr.vmem [resolvable:$true] %s145
          %148 = dma.hbm_to_vmem [thread:$0]  %s143, 128, %s146, %s135
        $region28: #{_lambda_.4} parent=23 // pred_fallthru
          _
      $region24: #{_lambda_.4} parent=5 // pred_fallthru
        _
      %p149 = scmp.le.s32.totalorder 1, %s12
      %p150 = scmp.lt.s32.totalorder %s12, 3
      %p151 = pnand %p149, %p150
      %p152 = pneg %p151
      // Predicated region
      $region29: #{_lambda_.4} parent=5 // pred_check
        _
      $region30: #{_lambda_.4} parent=5 // pred_check_branch
        %154 = sbr.rel (%p151) target = $region32
      $region31: #{_lambda_.4} parent=5 // pred_region
        %s155 = ssub.s32 %s12, 1
        %s156 = sand.u32 %s25, 1
        %s157 = scalar_lea.sflag [#allocation4], %s156
        %s158 = sand.u32 %s25, 1
        %s159 = smul.addr %s158, 8
        %s160 = scalar_lea.vmem [#allocation3], %s159
        // Predicated region
        $region33: #{_lambda_.4} parent=31 // pred_check
          %p161 = pneg %p38
        $region34: #{_lambda_.4} parent=31 // pred_check_branch
          %163 = sbr.rel (%p161) target = $region36
        $region35: #{_lambda_.4} parent=31 // pred_region
          %164 = dma.done %s157, 128
        $region36: #{_lambda_.4} parent=31 // pred_fallthru
          _
        %s165 = sand.u32 %s25, 1
        %s166 = scalar_lea.sflag [#allocation4], %s165
        %s167 = sand.u32 %s25, 1
        %s168 = smul.addr %s167, 8
        %s169 = scalar_lea.vmem [#allocation3], %s168
        %p170 = pneg %p38
        %p171 = pneg %p35
        %p172 = pneg %p59
        %p173 = pneg %p56
        %p174 = pneg %p80
        %p175 = pneg %p77
        %p176 = pneg %p106
        %p177 = pneg %p103
        %p178 = scmp.lt.s32.totalorder %s17, 1
        %s179 = scalar_select %p178, %s17, 1
        %s180 = smul.addr %s179, 2
        %s181 = smul.addr %s180, 8
        %s182 = scalar_lea.vmem %s3, %s181
        %p183 = scmp.lt.s32.totalorder %s17, 1
        %s184 = scalar_select %p183, %s17, 1
        %s185 = smul.addr %s184, 2
        %s186 = smul.addr %s185, 8
        %s187 = scalar_lea.vmem %s3, %s186
        %v188 = vld [vmem:[%s160] sm:$0xff]
        %v189 = vld [vmem:[%s1] sm:$0xff]
        %v190 = vld [vmem:[%s1 + $0x8] sm:$0xff]
        %v191 = vld [vmem:[%s2] sm:$0xff]
        %v192 = vld [vmem:[%s2 + $0x8] sm:$0xff]
        %vm193 = vcmask 23552
        %194 = vst.msk [vmem:[#allocation2] sm:$0xff] %vm193, 0.0
        %196 = vrot.lane.b32.xlu0 %v188, 3
        %v197 = vpop.permute.xlu0 %196
        %vm199 = vcmask 130072
        %200 = vst.msk [vmem:[#allocation2] sm:$0xff] %vm199, %v197
        %vm201 = vcmask 15360
        %202 = vst.msk [vmem:[#allocation2 + $0x8] sm:$0xff] %vm201, 0.0
        %203 = vrot.lane.b32.xlu0 %v188, 2
        %v204 = vpop.permute.xlu0 %203
        %vm206 = vcmask 130064
        %207 = vst.msk [vmem:[#allocation2 + $0x8] sm:$0xff] %vm206, %v204
        %vm208 = vcmask 7168
        %209 = vst.msk [vmem:[#allocation2 + $0x10] sm:$0xff] %vm208, 0.0
        %210 = vrot.lane.b32.xlu0 %v188, 1
        %v211 = vpop.permute.xlu0 %210
        %vm213 = vcmask 130056
        %214 = vst.msk [vmem:[#allocation2 + $0x10] sm:$0xff] %vm213, %v211
        %vm215 = vcmask 130048
        %216 = vst.msk [vmem:[#allocation2 + $0x18] sm:$0xff] %vm215, %v188
        %vm217 = vcmask 130168
        %218 = vst.msk [vmem:[#allocation2 + $0x20] sm:$0xff] %vm217, 0.0
        %219 = vrot.lane.b32.xlu0 %v188, 127
        %v220 = vpop.permute.xlu0 %219
        %vm222 = vcmask 121856
        %223 = vst.msk [vmem:[#allocation2 + $0x20] sm:$0xff] %vm222, %v220
        %vm224 = vcmask 130160
        %225 = vst.msk [vmem:[#allocation2 + $0x28] sm:$0xff] %vm224, 0.0
        %226 = vrot.lane.b32.xlu0 %v188, 126
        %v227 = vpop.permute.xlu0 %226
        %vm229 = vcmask 113664
        %230 = vst.msk [vmem:[#allocation2 + $0x28] sm:$0xff] %vm229, %v227
        %vm231 = vcmask 130152
        %232 = vst.msk [vmem:[#allocation2 + $0x30] sm:$0xff] %vm231, 0.0
        %233 = vrot.lane.b32.xlu0 %v188, 125
        %v234 = vpop.permute.xlu0 %233
        %vm236 = vcmask 105472
        %237 = vst.msk [vmem:[#allocation2 + $0x30] sm:$0xff] %vm236, %v234
        %v238 = vld [vmem:[#allocation2] sm:$0xff]
        %v239 = vld [vmem:[#allocation2 + $0x8] sm:$0xff]
        %v240 = vld [vmem:[#allocation2 + $0x10] sm:$0xff]
        %v241 = vld [vmem:[#allocation2 + $0x18] sm:$0xff]
        %v242 = vld [vmem:[#allocation2 + $0x20] sm:$0xff]
        %v243 = vld [vmem:[#allocation2 + $0x28] sm:$0xff]
        %v244 = vld [vmem:[#allocation2 + $0x30] sm:$0xff]
        %246 = vset.pattern.permute.xlu0 0
        %247 = vperm.xlu0 %246, %v191
        %v248 = vpop.permute.xlu0 %247
        %251 = vset.pattern.permute.xlu0 0
        %252 = vperm.xlu0 %251, %v192
        %v253 = vpop.permute.xlu0 %252
        %vm255 = vcmask 457728
        %v257 = vsel %vm255, %v189, 0
        %v260 = vsel %vm255, %v190, 0
        %262 = vmatprep.subr.mxu0 0.0
        %263 = vmatpush1.msra.mxu0 %v238
        %264 = vmatprep.subr.mxu0 0.0
        %265 = vmatpush1.msra.mxu0 %v239
        %266 = vmatprep.subr.mxu0 0.0
        %267 = vmatpush1.msra.mxu0 %v240
        %268 = vmatprep.subr.mxu0 0.0
        %269 = vmatpush1.msra.mxu0 %v241
        %270 = vmatprep.subr.mxu0 0.0
        %271 = vmatpush1.msra.mxu0 %v242
        %272 = vmatprep.subr.mxu0 0.0
        %273 = vmatpush1.msra.mxu0 %v243
        %274 = vmatprep.subr.mxu0 0.0
        %275 = vmatpush1.msra.mxu0 %v244
        %276 = vmatprep.subr.mxu0 0.0
        %277 = vmatpush1.msra.mxu0 0.0
        %278 = vmatprep.subr.mxu0 0.0
        %279 = vmatpush1.msra.mxu0 0.0
        %280 = vmatprep.subr.mxu0 0.0
        %281 = vmatpush1.msra.mxu0 0.0
        %282 = vmatprep.subr.mxu0 0.0
        %283 = vmatpush1.msra.mxu0 0.0
        %284 = vmatprep.subr.mxu0 0.0
        %285 = vmatpush1.msra.mxu0 0.0
        %286 = vmatprep.subr.mxu0 0.0
        %287 = vmatpush1.msra.mxu0 0.0
        %288 = vmatprep.subr.mxu0 0.0
        %289 = vmatpush1.msra.mxu0 0.0
        %290 = vmatprep.subr.mxu0 0.0
        %291 = vmatpush1.msra.mxu0 0.0
        %292 = vmatprep.subr.mxu0 0.0
        %293 = vmatpush1.msra.mxu0 0.0
        %294 = vmatprep.subr.mxu0 0.0
        %295 = vmatpush1.msra.mxu0 0.0
        %296 = vmatprep.subr.mxu0 0.0
        %297 = vmatpush1.msra.mxu0 0.0
        %298 = vmatprep.subr.mxu0 0.0
        %299 = vmatpush1.msra.mxu0 0.0
        %300 = vmatprep.subr.mxu0 0.0
        %301 = vmatpush1.msra.mxu0 0.0
        %302 = vmatprep.subr.mxu0 0.0
        %303 = vmatpush1.msra.mxu0 0.0
        %304 = vmatprep.subr.mxu0 0.0
        %305 = vmatpush1.msra.mxu0 0.0
        %306 = vmatprep.subr.mxu0 0.0
        %307 = vmatpush1.msra.mxu0 0.0
        %308 = vmatprep.subr.mxu0 0.0
        %309 = vmatpush1.msra.mxu0 0.0
        %310 = vmatprep.subr.mxu0 0.0
        %311 = vmatpush1.msra.mxu0 0.0
        %312 = vmatprep.subr.mxu0 0.0
        %313 = vmatpush1.msra.mxu0 0.0
        %314 = vmatprep.subr.mxu0 0.0
        %315 = vmatpush1.msra.mxu0 0.0
        %316 = vmatprep.subr.mxu0 0.0
        %317 = vmatpush1.msra.mxu0 0.0
        %318 = vmatprep.subr.mxu0 0.0
        %319 = vmatpush1.msra.mxu0 0.0
        %320 = vmatprep.subr.mxu0 0.0
        %321 = vmatpush1.msra.mxu0 0.0
        %322 = vmatprep.subr.mxu0 0.0
        %323 = vmatpush1.msra.mxu0 0.0
        %324 = vmatprep.subr.mxu0 0.0
        %325 = vmatpush1.msra.mxu0 0.0
        %326 = vmatprep.mubr.f32.mxu0 0.0
        %327 = vmatmul.mubr.f32.gmra.mrb[0].mxu0 %v257
        %v328 = vpop.f32.mrb[0].mxu0
        %v329 = vadd.f32 %v248, %v328
        %v330 = vpop.f32.mrb[0].mxu0
        %331 = vmatprep.mubr.f32.mxu0 0.0
        %332 = vmatmul.mubr.f32.gmra.mrb[0].mxu0 %v260
        %v333 = vpop.f32.mrb[0].mxu0
        %v334 = vadd.f32 %v253, %v333
        %v335 = vpop.f32.mrb[0].mxu0
        %336 = vdwg.mxu0
        %337 = vst.msk [vmem:[%s187] sm:$0xff] %vm215, %v329
        %338 = vst.msk [vmem:[%s187 + $0x8] sm:$0xff] %vm215, %v334
        %p339 = scmp.lt.s32.totalorder %s17, 1
        %s340 = scalar_select %p339, %s17, 1
        %s341 = smul.addr %s340, 2
        %s342 = smul.addr %s341, 8
        %s343 = scalar_lea.vmem %s3, %s342
        // Predicated region
        $region37: #{_lambda_.4} parent=31 // pred_check
          %p344 = pneg %p103
        $region38: #{_lambda_.4} parent=31 // pred_check_branch
          %346 = sbr.rel (%p344) target = $region40
        $region39: #{_lambda_.4} parent=31 // pred_region
          _
        $region40: #{_lambda_.4} parent=31 // pred_fallthru
          _
      $region32: #{_lambda_.4} parent=5 // pred_fallthru
        _
      %p347 = scmp.le.s32.totalorder 2, %s12
      // Predicated region
      $region41: #{_lambda_.4} parent=5 // pred_check
        %p348 = pneg %p347
      $region42: #{_lambda_.4} parent=5 // pred_check_branch
        %350 = sbr.rel (%p348) target = $region44
      $region43: #{_lambda_.4} parent=5 // pred_region
        %s351 = ssub.s32 %s12, 2
        // Predicated region
        $region45: #{_lambda_.4} parent=43 // pred_check
          %p352 = pneg %p109
        $region46: #{_lambda_.4} parent=43 // pred_check_branch
          %354 = sbr.rel (%p352) target = $region48
        $region47: #{_lambda_.4} parent=43 // pred_region
          %p355 = scmp.lt.s32.totalorder %s18, 1
          %s356 = scalar_select %p355, %s18, 1
          %s357 = smul.addr %s356, 2
          %s358 = smul.addr %s357, 8
          %s359 = scalar_lea.vmem %s3, %s358
        $region48: #{_lambda_.4} parent=43 // pred_fallthru
          _
      $region44: #{_lambda_.4} parent=5 // pred_fallthru
        _
    $region6: #{_lambda_.4} parent=1 // loop_footer
      %s16 = sadd.s32 1, %s12
    $region7: #{_lambda_.4} parent=1 // loop_footer_branch
      %11 = sbr.rel target = $region3
    $region8: #{_lambda_.4} parent=1 // loop_exit
      _
    %360 = vsyncpa [#allocation4], 1
    %s361 = scalar_lea.sflag [#allocation4], 1
    %362 = vsyncpa %s361, 1

// kernel: _lambda_.7
$region0: #{_lambda_.7}
  #allocation0 [shape = 'u32[]', space=smem, size = 0x4, offset = 0x4, fixed_abs, tag = 'smem constant byte address 0x4 - core index']
  #allocation1 [shape = 'u32[144,128]{1,0:T(1,128)}', space=vmem, size = 0x12000, scoped, tag = 'internal scratch']
  #allocation2 [shape = 'f32[56,32]{1,0:T(8,128)}', space=vmem, size = 0x7000, scoped, tag = 'scratch operand']
  #allocation3 [shape = 'f32[1,1]{1,0:T(1,128)S(1)}', space=vmem, size = 0x200, scoped, tag = 'scoped memory for _lambda_.7']
  %s0 = inlined_call_operand.vmem [shape: f32[2,8,32], index: 0, kind: input, shape index: {}]
  %s1 = inlined_call_operand.vmem [shape: f32[1,56], index: 1, kind: input, shape index: {}]
  %s2 = inlined_call_operand.<no memory space> [shape: f32[1,1], index: 2, kind: input, shape index: {}]
  %s3 = inlined_call_operand.hbm [shape: f32[2,1,32], index: 3, kind: output, shape index: {}]
  %s4 = sld [smem:[#allocation0]]
  $region45: #{_lambda_.7} parent=0
    _
  %s6 = ssub.s32 1, %s4
  %s7 = scalar_select 0, %s6, %s4
  %v8 = vstv %s2
  %9 = vst [vmem:[#allocation3] sm:$0x1] %v8
  $region1: #{_lambda_.7} parent=0
    #allocation4 [shape = 'u8[1024]{0}', space=vmem, size = 0x400, scoped, tag = 'output window, operand 0']
    #allocation5 [shape = 's32[2]{0}', space=sflag, size = 0x8, scoped, tag = 'scoped memory for _lambda_.7']
    %10 = vsyncpa [#allocation5], 0
    %s11 = scalar_lea.sflag [#allocation5], 1
    %12 = vsyncpa %s11, 0
    loop: start=0, step=1, limit=4
    $region2: #{_lambda_.7} parent=1 // loop_pre_header
      _
    $region3: #{_lambda_.7} parent=1 // loop_header
      %s14 = sphi 0, %s18
      %p15 = scmp.ge.s32.totalorder %s14, 4
      %s24 = sphi 0, %s26
      %s27 = sphi 0, %s24
      %s28 = sphi 0, %s27
      %s44 = sphi 0, %s28
      %s48 = sphi 0, %s48
      %s50 = sphi 0, %s48
      %s51 = sphi 0, %s50
      %s65 = sphi 0, %s51
      %s69 = sphi 0, %s69
      %s71 = sphi 0, %s69
      %s72 = sphi 0, %s71
      %s86 = sphi 0, %s72
      %s92 = sphi 0, %s94
      %s95 = sphi 0, %s92
      %s96 = sphi 0, %s95
      %s112 = sphi 0, %s96
    $region4: #{_lambda_.7} parent=1 // loop_header_branch
      %17 = sbr.rel (%p15) target = $region8
    $region5: #{_lambda_.7} parent=1 // loop_body
      %s19 = ssub.s32 %s14, 1
      %s20 = ssub.s32 %s14, 2
      %s21 = sadd.s32 %s14, 1
      %s22 = ssub.s32 %s14, %s21
      %p23 = scmp.eq.s32.totalorder %s22, 0
      %s25 = sadd.s32 %s24, 1
      %s26 = scalar_select %p23, %s24, %s25
      %p29 = pneg %p23
      %p30 = scmp.eq.s32.totalorder %s14, 1
      %p31 = por %p29, %p30
      %p32 = scmp.ne.s32.totalorder %s24, %s27
      %p33 = scmp.eq.s32.totalorder %s14, 0
      %p34 = por %p32, %p33
      %p35 = scmp.ne.s32.totalorder %s24, %s27
      %p36 = scmp.eq.s32.totalorder %s19, 1
      %p37 = por %p35, %p36
      %p38 = scmp.ne.s32.totalorder %s27, %s28
      %p39 = scmp.eq.s32.totalorder %s19, 0
      %p40 = por %p38, %p39
      %p41 = scmp.ne.s32.totalorder %s27, %s28
      %p42 = scmp.eq.s32.totalorder %s20, 1
      %p43 = por %p41, %p42
      %p45 = scmp.ne.s32.totalorder %s28, %s44
      %p46 = scmp.eq.s32.totalorder %s20, 0
      %p47 = por %p45, %p46
      %s49 = sadd.s32 %s48, 1
      %p52 = scmp.eq.s32.totalorder %s14, 1
      %p53 = scmp.ne.s32.totalorder %s48, %s50
      %p54 = scmp.eq.s32.totalorder %s14, 0
      %p55 = por %p53, %p54
      %p56 = scmp.ne.s32.totalorder %s48, %s50
      %p57 = scmp.eq.s32.totalorder %s19, 1
      %p58 = por %p56, %p57
      %p59 = scmp.ne.s32.totalorder %s50, %s51
      %p60 = scmp.eq.s32.totalorder %s19, 0
      %p61 = por %p59, %p60
      %p62 = scmp.ne.s32.totalorder %s50, %s51
      %p63 = scmp.eq.s32.totalorder %s20, 1
      %p64 = por %p62, %p63
      %p66 = scmp.ne.s32.totalorder %s51, %s65
      %p67 = scmp.eq.s32.totalorder %s20, 0
      %p68 = por %p66, %p67
      %s70 = sadd.s32 %s69, 1
      %p73 = scmp.eq.s32.totalorder %s14, 1
      %p74 = scmp.ne.s32.totalorder %s69, %s71
      %p75 = scmp.eq.s32.totalorder %s14, 0
      %p76 = por %p74, %p75
      %p77 = scmp.ne.s32.totalorder %s69, %s71
      %p78 = scmp.eq.s32.totalorder %s19, 1
      %p79 = por %p77, %p78
      %p80 = scmp.ne.s32.totalorder %s71, %s72
      %p81 = scmp.eq.s32.totalorder %s19, 0
      %p82 = por %p80, %p81
      %p83 = scmp.ne.s32.totalorder %s71, %s72
      %p84 = scmp.eq.s32.totalorder %s20, 1
      %p85 = por %p83, %p84
      %p87 = scmp.ne.s32.totalorder %s72, %s86
      %p88 = scmp.eq.s32.totalorder %s20, 0
      %p89 = por %p87, %p88
      %s90 = ssub.s32 %s14, %s21
      %p91 = scmp.eq.s32.totalorder %s90, 0
      %s93 = sadd.s32 %s92, 1
      %s94 = scalar_select %p91, %s92, %s93
      %p97 = pneg %p91
      %p98 = scmp.eq.s32.totalorder %s14, 1
      %p99 = por %p97, %p98
      %p100 = scmp.ne.s32.totalorder %s92, %s95
      %p101 = scmp.eq.s32.totalorder %s14, 0
      %p102 = por %p100, %p101
      %p103 = scmp.ne.s32.totalorder %s92, %s95
      %p104 = scmp.eq.s32.totalorder %s19, 1
      %p105 = por %p103, %p104
      %p106 = scmp.ne.s32.totalorder %s95, %s96
      %p107 = scmp.eq.s32.totalorder %s19, 0
      %p108 = por %p106, %p107
      %p109 = scmp.ne.s32.totalorder %s95, %s96
      %p110 = scmp.eq.s32.totalorder %s20, 1
      %p111 = por %p109, %p110
      %p113 = scmp.ne.s32.totalorder %s96, %s112
      %p114 = scmp.eq.s32.totalorder %s20, 0
      %p115 = por %p113, %p114
      %p116 = scmp.le.s32.totalorder 1, %s14
      %p117 = scmp.lt.s32.totalorder %s14, 3
      %p118 = pnand %p116, %p117
      %p119 = pneg %p118
      // Predicated region
      $region9: #{_lambda_.7} parent=5 // pred_check
        _
      $region10: #{_lambda_.7} parent=5 // pred_check_branch
        %121 = sbr.rel (%p118) target = $region12
      $region11: #{_lambda_.7} parent=5 // pred_region
        %s122 = ssub.s32 %s14, 1
        // Predicated region
        $region13: #{_lambda_.7} parent=11 // pred_check
          %p123 = pneg %p61
        $region14: #{_lambda_.7} parent=11 // pred_check_branch
          %125 = sbr.rel (%p123) target = $region16
        $region15: #{_lambda_.7} parent=11 // pred_region
          _
        $region16: #{_lambda_.7} parent=11 // pred_fallthru
          _
        // Predicated region
        $region17: #{_lambda_.7} parent=11 // pred_check
          %p126 = pneg %p82
        $region18: #{_lambda_.7} parent=11 // pred_check_branch
          %128 = sbr.rel (%p126) target = $region20
        $region19: #{_lambda_.7} parent=11 // pred_region
          _
        $region20: #{_lambda_.7} parent=11 // pred_fallthru
          _
      $region12: #{_lambda_.7} parent=5 // pred_fallthru
        _
      %p129 = scmp.lt.s32.totalorder %s14, 2
      // Predicated region
      $region21: #{_lambda_.7} parent=5 // pred_check
        %p130 = pneg %p129
      $region22: #{_lambda_.7} parent=5 // pred_check_branch
        %132 = sbr.rel (%p130) target = $region24
      $region23: #{_lambda_.7} parent=5 // pred_region
        // Predicated region
        $region25: #{_lambda_.7} parent=23 // pred_check
          %p133 = pneg %p34
        $region26: #{_lambda_.7} parent=23 // pred_check_branch
          %135 = sbr.rel (%p133) target = $region28
        $region27: #{_lambda_.7} parent=23 // pred_region
          %p136 = scmp.lt.s32.totalorder %s14, 1
          %s137 = scalar_select %p136, %s14, 1
          %s138 = smul.addr %s137, 8
          %s139 = scalar_lea.vmem %s0, %s138
        $region28: #{_lambda_.7} parent=23 // pred_fallthru
          _
      $region24: #{_lambda_.7} parent=5 // pred_fallthru
        _
      %p140 = scmp.le.s32.totalorder 1, %s14
      %p141 = scmp.lt.s32.totalorder %s14, 3
      %p142 = pnand %p140, %p141
      %p143 = pneg %p142
      // Predicated region
      $region29: #{_lambda_.7} parent=5 // pred_check
        _
      $region30: #{_lambda_.7} parent=5 // pred_check_branch
        %145 = sbr.rel (%p142) target = $region32
      $region31: #{_lambda_.7} parent=5 // pred_region
        %s146 = ssub.s32 %s14, 1
        %p147 = scmp.lt.s32.totalorder %s19, 1
        %s148 = scalar_select %p147, %s19, 1
        %s149 = smul.addr %s148, 8
        %s150 = scalar_lea.vmem %s0, %s149
        %p151 = pneg %p40
        %p152 = pneg %p37
        %p153 = pneg %p61
        %p154 = pneg %p58
        %p155 = pneg %p82
        %p156 = pneg %p79
        %p157 = pneg %p108
        %p158 = pneg %p105
        %s159 = sand.u32 %s95, 1
        %s160 = scalar_lea.sflag [#allocation5], %s159
        %s161 = sand.u32 %s95, 1
        %s162 = scalar_lea.vmem [#allocation4], %s161
        %p163 = scmp.lt.s32.totalorder %s19, 1
        %s164 = scalar_select %p163, %s19, 1
        %s165 = smul.addr %s164, 8
        %s166 = scalar_lea.vmem %s0, %s165
        %v167 = vld [vmem:[%s166] sm:$0xff]
        %vm168 = vcmp.ge.f32.partialorder %v167, 0.0
        %v169 = vmul.f32 %v167, 0.1
        %v170 = vsel %vm168, %v167, %v169
        %v171 = vld [vmem:[%s1] sm:$0x1]
        %v172 = vld [vmem:[#allocation3] sm:$0x1]
        %vm173 = vcmask 23552
        %174 = vst.msk [vmem:[#allocation2] sm:$0xff] %vm173, 0.0
        %176 = vrot.lane.b32.xlu0 %v170, 3
        %v177 = vpop.permute.xlu0 %176
        %vm179 = vcmask 261144
        %180 = vst.msk [vmem:[#allocation2] sm:$0xff] %vm179, %v177
        %vm181 = vcmask 15360
        %182 = vst.msk [vmem:[#allocation2 + $0x8] sm:$0xff] %vm181, 0.0
        %183 = vrot.lane.b32.xlu0 %v170, 2
        %v184 = vpop.permute.xlu0 %183
        %vm186 = vcmask 261136
        %187 = vst.msk [vmem:[#allocation2 + $0x8] sm:$0xff] %vm186, %v184
        %vm188 = vcmask 7168
        %189 = vst.msk [vmem:[#allocation2 + $0x10] sm:$0xff] %vm188, 0.0
        %190 = vrot.lane.b32.xlu0 %v170, 1
        %v191 = vpop.permute.xlu0 %190
        %vm193 = vcmask 261128
        %194 = vst.msk [vmem:[#allocation2 + $0x10] sm:$0xff] %vm193, %v191
        %vm195 = vcmask 261120
        %196 = vst.msk [vmem:[#allocation2 + $0x18] sm:$0xff] %vm195, %v170
        %vm197 = vcmask 261368
        %198 = vst.msk [vmem:[#allocation2 + $0x20] sm:$0xff] %vm197, 0.0
        %199 = vrot.lane.b32.xlu0 %v170, 127
        %v200 = vpop.permute.xlu0 %199
        %vm202 = vcmask 252928
        %203 = vst.msk [vmem:[#allocation2 + $0x20] sm:$0xff] %vm202, %v200
        %vm204 = vcmask 261360
        %205 = vst.msk [vmem:[#allocation2 + $0x28] sm:$0xff] %vm204, 0.0
        %206 = vrot.lane.b32.xlu0 %v170, 126
        %v207 = vpop.permute.xlu0 %206
        %vm209 = vcmask 244736
        %210 = vst.msk [vmem:[#allocation2 + $0x28] sm:$0xff] %vm209, %v207
        %vm211 = vcmask 261352
        %212 = vst.msk [vmem:[#allocation2 + $0x30] sm:$0xff] %vm211, 0.0
        %213 = vrot.lane.b32.xlu0 %v170, 125
        %v214 = vpop.permute.xlu0 %213
        %vm216 = vcmask 236544
        %217 = vst.msk [vmem:[#allocation2 + $0x30] sm:$0xff] %vm216, %v214
        %v218 = vld [vmem:[#allocation2] sm:$0xff]
        %v219 = vld [vmem:[#allocation2 + $0x8] sm:$0xff]
        %v220 = vld [vmem:[#allocation2 + $0x10] sm:$0xff]
        %v221 = vld [vmem:[#allocation2 + $0x18] sm:$0xff]
        %v222 = vld [vmem:[#allocation2 + $0x20] sm:$0xff]
        %v223 = vld [vmem:[#allocation2 + $0x28] sm:$0xff]
        %v224 = vld [vmem:[#allocation2 + $0x30] sm:$0xff]
        %226 = vset.pattern.permute.xlu0 0
        %227 = vperm.xlu0 %226, %v172
        %v228 = vpop.permute.xlu0 %227
        %v230 = vlaneseq
        %v231 = vshrl.u32 %v230, 7
        %v232 = vsub.s32 0, %v231
        %v233 = vrot.slane %v228, %v232
        %vm234 = vcmask 457728
        %v236 = vsel %vm234, %v171, 0
        %238 = vmatprep.subr.mxu0 0.0
        %239 = vmatpush1.msra.mxu0 %v218
        %240 = vmatprep.subr.mxu0 0.0
        %241 = vmatpush1.msra.mxu0 %v219
        %242 = vmatprep.subr.mxu0 0.0
        %243 = vmatpush1.msra.mxu0 %v220
        %244 = vmatprep.subr.mxu0 0.0
        %245 = vmatpush1.msra.mxu0 %v221
        %246 = vmatprep.subr.mxu0 0.0
        %247 = vmatpush1.msra.mxu0 %v222
        %248 = vmatprep.subr.mxu0 0.0
        %249 = vmatpush1.msra.mxu0 %v223
        %250 = vmatprep.subr.mxu0 0.0
        %251 = vmatpush1.msra.mxu0 %v224
        %252 = vmatprep.subr.mxu0 0.0
        %253 = vmatpush1.msra.mxu0 0.0
        %254 = vmatprep.subr.mxu0 0.0
        %255 = vmatpush1.msra.mxu0 0.0
        %256 = vmatprep.subr.mxu0 0.0
        %257 = vmatpush1.msra.mxu0 0.0
        %258 = vmatprep.subr.mxu0 0.0
        %259 = vmatpush1.msra.mxu0 0.0
        %260 = vmatprep.subr.mxu0 0.0
        %261 = vmatpush1.msra.mxu0 0.0
        %262 = vmatprep.subr.mxu0 0.0
        %263 = vmatpush1.msra.mxu0 0.0
        %264 = vmatprep.subr.mxu0 0.0
        %265 = vmatpush1.msra.mxu0 0.0
        %266 = vmatprep.subr.mxu0 0.0
        %267 = vmatpush1.msra.mxu0 0.0
        %268 = vmatprep.subr.mxu0 0.0
        %269 = vmatpush1.msra.mxu0 0.0
        %270 = vmatprep.subr.mxu0 0.0
        %271 = vmatpush1.msra.mxu0 0.0
        %272 = vmatprep.subr.mxu0 0.0
        %273 = vmatpush1.msra.mxu0 0.0
        %274 = vmatprep.subr.mxu0 0.0
        %275 = vmatpush1.msra.mxu0 0.0
        %276 = vmatprep.subr.mxu0 0.0
        %277 = vmatpush1.msra.mxu0 0.0
        %278 = vmatprep.subr.mxu0 0.0
        %279 = vmatpush1.msra.mxu0 0.0
        %280 = vmatprep.subr.mxu0 0.0
        %281 = vmatpush1.msra.mxu0 0.0
        %282 = vmatprep.subr.mxu0 0.0
        %283 = vmatpush1.msra.mxu0 0.0
        %284 = vmatprep.subr.mxu0 0.0
        %285 = vmatpush1.msra.mxu0 0.0
        %286 = vmatprep.subr.mxu0 0.0
        %287 = vmatpush1.msra.mxu0 0.0
        %288 = vmatprep.subr.mxu0 0.0
        %289 = vmatpush1.msra.mxu0 0.0
        %290 = vmatprep.subr.mxu0 0.0
        %291 = vmatpush1.msra.mxu0 0.0
        %292 = vmatprep.subr.mxu0 0.0
        %293 = vmatpush1.msra.mxu0 0.0
        %294 = vmatprep.subr.mxu0 0.0
        %295 = vmatpush1.msra.mxu0 0.0
        %296 = vmatprep.subr.mxu0 0.0
        %297 = vmatpush1.msra.mxu0 0.0
        %298 = vmatprep.subr.mxu0 0.0
        %299 = vmatpush1.msra.mxu0 0.0
        %300 = vmatprep.subr.mxu0 0.0
        %301 = vmatpush1.msra.mxu0 0.0
        %302 = vmatprep.mubr.f32.mxu0 0.0
        %303 = vmatmul.mubr.f32.gmra.mrb[0].mxu0 %v236
        %v304 = vpop.f32.mrb[0].mxu0
        %v305 = vadd.f32 %v233, %v304
        %v306 = vpop.f32.mrb[0].mxu0
        %307 = vdwg.mxu0
        %v308 = vtanh.pop %v305
        %vm309 = vcmask 253952
        %310 = vst.msk [vmem:[%s162] sm:$0x1] %vm309, %v308
        %s311 = sand.u32 %s95, 1
        %s312 = scalar_lea.sflag [#allocation5], %s311
        %s313 = sand.u32 %s95, 1
        %s314 = scalar_lea.vmem [#allocation4], %s313
        // Predicated region
        $region33: #{_lambda_.7} parent=31 // pred_check
          %p315 = pneg %p105
        $region34: #{_lambda_.7} parent=31 // pred_check_branch
          %317 = sbr.rel (%p315) target = $region36
        $region35: #{_lambda_.7} parent=31 // pred_region
          %s319 = ssub.s32 16, 16
          %320 = vsyncadd %s312, %s319
          %s321 = smul.addr %s19, 16
          %s322 = scalar_lea.hbm %s3, %s321
          %s324 = sshll.u32 %s314, 4
          %s325 = int_to_ptr.vmem [resolvable:$true] %s324
          %327 = dma.vmem_to_hbm [thread:$0]  %s325, 16, %s322, %s312
        $region36: #{_lambda_.7} parent=31 // pred_fallthru
          _
      $region32: #{_lambda_.7} parent=5 // pred_fallthru
        _
      %p328 = scmp.le.s32.totalorder 2, %s14
      // Predicated region
      $region37: #{_lambda_.7} parent=5 // pred_check
        %p329 = pneg %p328
      $region38: #{_lambda_.7} parent=5 // pred_check_branch
        %331 = sbr.rel (%p329) target = $region40
      $region39: #{_lambda_.7} parent=5 // pred_region
        %s332 = ssub.s32 %s14, 2
        // Predicated region
        $region41: #{_lambda_.7} parent=39 // pred_check
          %p333 = pneg %p111
        $region42: #{_lambda_.7} parent=39 // pred_check_branch
          %335 = sbr.rel (%p333) target = $region44
        $region43: #{_lambda_.7} parent=39 // pred_region
          %s336 = sand.u32 %s96, 1
          %s337 = scalar_lea.sflag [#allocation5], %s336
          %s338 = sand.u32 %s96, 1
          %s339 = scalar_lea.vmem [#allocation4], %s338
          %340 = dma.done %s337, 16
        $region44: #{_lambda_.7} parent=39 // pred_fallthru
          _
      $region40: #{_lambda_.7} parent=5 // pred_fallthru
        _
    $region6: #{_lambda_.7} parent=1 // loop_footer
      %s18 = sadd.s32 1, %s14
    $region7: #{_lambda_.7} parent=1 // loop_footer_branch
      %13 = sbr.rel target = $region3
    $region8: #{_lambda_.7} parent=1 // loop_exit
      _
    %341 = vsyncpa [#allocation5], 1
    %s342 = scalar_lea.sflag [#allocation5], 1
    %343 = vsyncpa %s342, 1

// kernel: _lambda_.6
$region0: #{_lambda_.6}
  #allocation0 [shape = 'u32[]', space=smem, size = 0x4, offset = 0x4, fixed_abs, tag = 'smem constant byte address 0x4 - core index']
  #allocation1 [shape = 'u32[144,128]{1,0:T(1,128)}', space=vmem, size = 0x12000, scoped, tag = 'internal scratch']
  #allocation2 [shape = 'f32[40,32]{1,0:T(8,128)}', space=vmem, size = 0x5000, scoped, tag = 'scratch operand']
  %s0 = inlined_call_operand.vmem [shape: f32[2,8,32], index: 0, kind: input, shape index: {}]
  %s1 = inlined_call_operand.vmem [shape: f32[8,24], index: 1, kind: input, shape index: {}]
  %s2 = inlined_call_operand.vmem [shape: f32[8,1], index: 2, kind: input, shape index: {}]
  %s3 = inlined_call_operand.vmem [shape: f32[8,24], index: 3, kind: input, shape index: {}]
  %s4 = inlined_call_operand.vmem [shape: f32[8,1], index: 4, kind: input, shape index: {}]
  %s5 = inlined_call_operand.vmem [shape: f32[8,40], index: 5, kind: input, shape index: {}]
  %s6 = inlined_call_operand.vmem [shape: f32[8,1], index: 6, kind: input, shape index: {}]
  %s7 = inlined_call_operand.vmem [shape: f32[8,40], index: 7, kind: input, shape index: {}]
  %s8 = inlined_call_operand.vmem [shape: f32[8,1], index: 8, kind: input, shape index: {}]
  %s9 = inlined_call_operand.vmem [shape: f32[2,8,32], index: 9, kind: output, shape index: {}]
  %s10 = sld [smem:[#allocation0]]
  $region69: #{_lambda_.6} parent=0
    _
  %s12 = ssub.s32 1, %s10
  %s13 = scalar_select 0, %s12, %s10
  loop: start=0, step=1, limit=4
  $region2: #{_lambda_.6} parent=0 // loop_pre_header
    _
  $region3: #{_lambda_.6} parent=0 // loop_header
    %s15 = sphi 0, %s19
    %p16 = scmp.ge.s32.totalorder %s15, 4
    %s25 = sphi 0, %s27
    %s28 = sphi 0, %s25
    %s29 = sphi 0, %s28
    %s45 = sphi 0, %s29
    %s49 = sphi 0, %s49
    %s51 = sphi 0, %s49
    %s52 = sphi 0, %s51
    %s66 = sphi 0, %s52
    %s70 = sphi 0, %s70
    %s72 = sphi 0, %s70
    %s73 = sphi 0, %s72
    %s87 = sphi 0, %s73
    %s91 = sphi 0, %s91
    %s93 = sphi 0, %s91
    %s94 = sphi 0, %s93
    %s108 = sphi 0, %s94
    %s112 = sphi 0, %s112
    %s114 = sphi 0, %s112
    %s115 = sphi 0, %s114
    %s129 = sphi 0, %s115
    %s133 = sphi 0, %s133
    %s135 = sphi 0, %s133
    %s136 = sphi 0, %s135
    %s150 = sphi 0, %s136
    %s154 = sphi 0, %s154
    %s156 = sphi 0, %s154
    %s157 = sphi 0, %s156
    %s171 = sphi 0, %s157
    %s175 = sphi 0, %s175
    %s177 = sphi 0, %s175
    %s178 = sphi 0, %s177
    %s192 = sphi 0, %s178
    %s196 = sphi 0, %s196
    %s198 = sphi 0, %s196
    %s199 = sphi 0, %s198
    %s213 = sphi 0, %s199
    %s219 = sphi 0, %s221
    %s222 = sphi 0, %s219
    %s223 = sphi 0, %s222
    %s239 = sphi 0, %s223
  $region4: #{_lambda_.6} parent=0 // loop_header_branch
    %18 = sbr.rel (%p16) target = $region8
  $region5: #{_lambda_.6} parent=0 // loop_body
    %s20 = ssub.s32 %s15, 1
    %s21 = ssub.s32 %s15, 2
    %s22 = sadd.s32 %s15, 1
    %s23 = ssub.s32 %s15, %s22
    %p24 = scmp.eq.s32.totalorder %s23, 0
    %s26 = sadd.s32 %s25, 1
    %s27 = scalar_select %p24, %s25, %s26
    %p30 = pneg %p24
    %p31 = scmp.eq.s32.totalorder %s15, 1
    %p32 = por %p30, %p31
    %p33 = scmp.ne.s32.totalorder %s25, %s28
    %p34 = scmp.eq.s32.totalorder %s15, 0
    %p35 = por %p33, %p34
    %p36 = scmp.ne.s32.totalorder %s25, %s28
    %p37 = scmp.eq.s32.totalorder %s20, 1
    %p38 = por %p36, %p37
    %p39 = scmp.ne.s32.totalorder %s28, %s29
    %p40 = scmp.eq.s32.totalorder %s20, 0
    %p41 = por %p39, %p40
    %p42 = scmp.ne.s32.totalorder %s28, %s29
    %p43 = scmp.eq.s32.totalorder %s21, 1
    %p44 = por %p42, %p43
    %p46 = scmp.ne.s32.totalorder %s29, %s45
    %p47 = scmp.eq.s32.totalorder %s21, 0
    %p48 = por %p46, %p47
    %s50 = sadd.s32 %s49, 1
    %p53 = scmp.eq.s32.totalorder %s15, 1
    %p54 = scmp.ne.s32.totalorder %s49, %s51
    %p55 = scmp.eq.s32.totalorder %s15, 0
    %p56 = por %p54, %p55
    %p57 = scmp.ne.s32.totalorder %s49, %s51
    %p58 = scmp.eq.s32.totalorder %s20, 1
    %p59 = por %p57, %p58
    %p60 = scmp.ne.s32.totalorder %s51, %s52
    %p61 = scmp.eq.s32.totalorder %s20, 0
    %p62 = por %p60, %p61
    %p63 = scmp.ne.s32.totalorder %s51, %s52
    %p64 = scmp.eq.s32.totalorder %s21, 1
    %p65 = por %p63, %p64
    %p67 = scmp.ne.s32.totalorder %s52, %s66
    %p68 = scmp.eq.s32.totalorder %s21, 0
    %p69 = por %p67, %p68
    %s71 = sadd.s32 %s70, 1
    %p74 = scmp.eq.s32.totalorder %s15, 1
    %p75 = scmp.ne.s32.totalorder %s70, %s72
    %p76 = scmp.eq.s32.totalorder %s15, 0
    %p77 = por %p75, %p76
    %p78 = scmp.ne.s32.totalorder %s70, %s72
    %p79 = scmp.eq.s32.totalorder %s20, 1
    %p80 = por %p78, %p79
    %p81 = scmp.ne.s32.totalorder %s72, %s73
    %p82 = scmp.eq.s32.totalorder %s20, 0
    %p83 = por %p81, %p82
    %p84 = scmp.ne.s32.totalorder %s72, %s73
    %p85 = scmp.eq.s32.totalorder %s21, 1
    %p86 = por %p84, %p85
    %p88 = scmp.ne.s32.totalorder %s73, %s87
    %p89 = scmp.eq.s32.totalorder %s21, 0
    %p90 = por %p88, %p89
    %s92 = sadd.s32 %s91, 1
    %p95 = scmp.eq.s32.totalorder %s15, 1
    %p96 = scmp.ne.s32.totalorder %s91, %s93
    %p97 = scmp.eq.s32.totalorder %s15, 0
    %p98 = por %p96, %p97
    %p99 = scmp.ne.s32.totalorder %s91, %s93
    %p100 = scmp.eq.s32.totalorder %s20, 1
    %p101 = por %p99, %p100
    %p102 = scmp.ne.s32.totalorder %s93, %s94
    %p103 = scmp.eq.s32.totalorder %s20, 0
    %p104 = por %p102, %p103
    %p105 = scmp.ne.s32.totalorder %s93, %s94
    %p106 = scmp.eq.s32.totalorder %s21, 1
    %p107 = por %p105, %p106
    %p109 = scmp.ne.s32.totalorder %s94, %s108
    %p110 = scmp.eq.s32.totalorder %s21, 0
    %p111 = por %p109, %p110
    %s113 = sadd.s32 %s112, 1
    %p116 = scmp.eq.s32.totalorder %s15, 1
    %p117 = scmp.ne.s32.totalorder %s112, %s114
    %p118 = scmp.eq.s32.totalorder %s15, 0
    %p119 = por %p117, %p118
    %p120 = scmp.ne.s32.totalorder %s112, %s114
    %p121 = scmp.eq.s32.totalorder %s20, 1
    %p122 = por %p120, %p121
    %p123 = scmp.ne.s32.totalorder %s114, %s115
    %p124 = scmp.eq.s32.totalorder %s20, 0
    %p125 = por %p123, %p124
    %p126 = scmp.ne.s32.totalorder %s114, %s115
    %p127 = scmp.eq.s32.totalorder %s21, 1
    %p128 = por %p126, %p127
    %p130 = scmp.ne.s32.totalorder %s115, %s129
    %p131 = scmp.eq.s32.totalorder %s21, 0
    %p132 = por %p130, %p131
    %s134 = sadd.s32 %s133, 1
    %p137 = scmp.eq.s32.totalorder %s15, 1
    %p138 = scmp.ne.s32.totalorder %s133, %s135
    %p139 = scmp.eq.s32.totalorder %s15, 0
    %p140 = por %p138, %p139
    %p141 = scmp.ne.s32.totalorder %s133, %s135
    %p142 = scmp.eq.s32.totalorder %s20, 1
    %p143 = por %p141, %p142
    %p144 = scmp.ne.s32.totalorder %s135, %s136
    %p145 = scmp.eq.s32.totalorder %s20, 0
    %p146 = por %p144, %p145
    %p147 = scmp.ne.s32.totalorder %s135, %s136
    %p148 = scmp.eq.s32.totalorder %s21, 1
    %p149 = por %p147, %p148
    %p151 = scmp.ne.s32.totalorder %s136, %s150
    %p152 = scmp.eq.s32.totalorder %s21, 0
    %p153 = por %p151, %p152
    %s155 = sadd.s32 %s154, 1
    %p158 = scmp.eq.s32.totalorder %s15, 1
    %p159 = scmp.ne.s32.totalorder %s154, %s156
    %p160 = scmp.eq.s32.totalorder %s15, 0
    %p161 = por %p159, %p160
    %p162 = scmp.ne.s32.totalorder %s154, %s156
    %p163 = scmp.eq.s32.totalorder %s20, 1
    %p164 = por %p162, %p163
    %p165 = scmp.ne.s32.totalorder %s156, %s157
    %p166 = scmp.eq.s32.totalorder %s20, 0
    %p167 = por %p165, %p166
    %p168 = scmp.ne.s32.totalorder %s156, %s157
    %p169 = scmp.eq.s32.totalorder %s21, 1
    %p170 = por %p168, %p169
    %p172 = scmp.ne.s32.totalorder %s157, %s171
    %p173 = scmp.eq.s32.totalorder %s21, 0
    %p174 = por %p172, %p173
    %s176 = sadd.s32 %s175, 1
    %p179 = scmp.eq.s32.totalorder %s15, 1
    %p180 = scmp.ne.s32.totalorder %s175, %s177
    %p181 = scmp.eq.s32.totalorder %s15, 0
    %p182 = por %p180, %p181
    %p183 = scmp.ne.s32.totalorder %s175, %s177
    %p184 = scmp.eq.s32.totalorder %s20, 1
    %p185 = por %p183, %p184
    %p186 = scmp.ne.s32.totalorder %s177, %s178
    %p187 = scmp.eq.s32.totalorder %s20, 0
    %p188 = por %p186, %p187
    %p189 = scmp.ne.s32.totalorder %s177, %s178
    %p190 = scmp.eq.s32.totalorder %s21, 1
    %p191 = por %p189, %p190
    %p193 = scmp.ne.s32.totalorder %s178, %s192
    %p194 = scmp.eq.s32.totalorder %s21, 0
    %p195 = por %p193, %p194
    %s197 = sadd.s32 %s196, 1
    %p200 = scmp.eq.s32.totalorder %s15, 1
    %p201 = scmp.ne.s32.totalorder %s196, %s198
    %p202 = scmp.eq.s32.totalorder %s15, 0
    %p203 = por %p201, %p202
    %p204 = scmp.ne.s32.totalorder %s196, %s198
    %p205 = scmp.eq.s32.totalorder %s20, 1
    %p206 = por %p204, %p205
    %p207 = scmp.ne.s32.totalorder %s198, %s199
    %p208 = scmp.eq.s32.totalorder %s20, 0
    %p209 = por %p207, %p208
    %p210 = scmp.ne.s32.totalorder %s198, %s199
    %p211 = scmp.eq.s32.totalorder %s21, 1
    %p212 = por %p210, %p211
    %p214 = scmp.ne.s32.totalorder %s199, %s213
    %p215 = scmp.eq.s32.totalorder %s21, 0
    %p216 = por %p214, %p215
    %s217 = ssub.s32 %s15, %s22
    %p218 = scmp.eq.s32.totalorder %s217, 0
    %s220 = sadd.s32 %s219, 1
    %s221 = scalar_select %p218, %s219, %s220
    %p224 = pneg %p218
    %p225 = scmp.eq.s32.totalorder %s15, 1
    %p226 = por %p224, %p225
    %p227 = scmp.ne.s32.totalorder %s219, %s222
    %p228 = scmp.eq.s32.totalorder %s15, 0
    %p229 = por %p227, %p228
    %p230 = scmp.ne.s32.totalorder %s219, %s222
    %p231 = scmp.eq.s32.totalorder %s20, 1
    %p232 = por %p230, %p231
    %p233 = scmp.ne.s32.totalorder %s222, %s223
    %p234 = scmp.eq.s32.totalorder %s20, 0
    %p235 = por %p233, %p234
    %p236 = scmp.ne.s32.totalorder %s222, %s223
    %p237 = scmp.eq.s32.totalorder %s21, 1
    %p238 = por %p236, %p237
    %p240 = scmp.ne.s32.totalorder %s223, %s239
    %p241 = scmp.eq.s32.totalorder %s21, 0
    %p242 = por %p240, %p241
    %p243 = scmp.le.s32.totalorder 1, %s15
    %p244 = scmp.lt.s32.totalorder %s15, 3
    %p245 = pnand %p243, %p244
    %p246 = pneg %p245
    // Predicated region
    $region9: #{_lambda_.6} parent=5 // pred_check
      _
    $region10: #{_lambda_.6} parent=5 // pred_check_branch
      %248 = sbr.rel (%p245) target = $region12
    $region11: #{_lambda_.6} parent=5 // pred_region
      %s249 = ssub.s32 %s15, 1
      // Predicated region
      $region13: #{_lambda_.6} parent=11 // pred_check
        %p250 = pneg %p62
      $region14: #{_lambda_.6} parent=11 // pred_check_branch
        %252 = sbr.rel (%p250) target = $region16
      $region15: #{_lambda_.6} parent=11 // pred_region
        _
      $region16: #{_lambda_.6} parent=11 // pred_fallthru
        _
      // Predicated region
      $region17: #{_lambda_.6} parent=11 // pred_check
        %p253 = pneg %p83
      $region18: #{_lambda_.6} parent=11 // pred_check_branch
        %255 = sbr.rel (%p253) target = $region20
      $region19: #{_lambda_.6} parent=11 // pred_region
        _
      $region20: #{_lambda_.6} parent=11 // pred_fallthru
        _
      // Predicated region
      $region21: #{_lambda_.6} parent=11 // pred_check
        %p256 = pneg %p104
      $region22: #{_lambda_.6} parent=11 // pred_check_branch
        %258 = sbr.rel (%p256) target = $region24
      $region23: #{_lambda_.6} parent=11 // pred_region
        _
      $region24: #{_lambda_.6} parent=11 // pred_fallthru
        _
      // Predicated region
      $region25: #{_lambda_.6} parent=11 // pred_check
        %p259 = pneg %p125
      $region26: #{_lambda_.6} parent=11 // pred_check_branch
        %261 = sbr.rel (%p259) target = $region28
      $region27: #{_lambda_.6} parent=11 // pred_region
        _
      $region28: #{_lambda_.6} parent=11 // pred_fallthru
        _
      // Predicated region
      $region29: #{_lambda_.6} parent=11 // pred_check
        %p262 = pneg %p146
      $region30: #{_lambda_.6} parent=11 // pred_check_branch
        %264 = sbr.rel (%p262) target = $region32
      $region31: #{_lambda_.6} parent=11 // pred_region
        _
      $region32: #{_lambda_.6} parent=11 // pred_fallthru
        _
      // Predicated region
      $region33: #{_lambda_.6} parent=11 // pred_check
        %p265 = pneg %p167
      $region34: #{_lambda_.6} parent=11 // pred_check_branch
        %267 = sbr.rel (%p265) target = $region36
      $region35: #{_lambda_.6} parent=11 // pred_region
        _
      $region36: #{_lambda_.6} parent=11 // pred_fallthru
        _
      // Predicated region
      $region37: #{_lambda_.6} parent=11 // pred_check
        %p268 = pneg %p188
      $region38: #{_lambda_.6} parent=11 // pred_check_branch
        %270 = sbr.rel (%p268) target = $region40
      $region39: #{_lambda_.6} parent=11 // pred_region
        _
      $region40: #{_lambda_.6} parent=11 // pred_fallthru
        _
      // Predicated region
      $region41: #{_lambda_.6} parent=11 // pred_check
        %p271 = pneg %p209
      $region42: #{_lambda_.6} parent=11 // pred_check_branch
        %273 = sbr.rel (%p271) target = $region44
      $region43: #{_lambda_.6} parent=11 // pred_region
        _
      $region44: #{_lambda_.6} parent=11 // pred_fallthru
        _
    $region12: #{_lambda_.6} parent=5 // pred_fallthru
      _
    %p274 = scmp.lt.s32.totalorder %s15, 2
    // Predicated region
    $region45: #{_lambda_.6} parent=5 // pred_check
      %p275 = pneg %p274
    $region46: #{_lambda_.6} parent=5 // pred_check_branch
      %277 = sbr.rel (%p275) target = $region48
    $region47: #{_lambda_.6} parent=5 // pred_region
      // Predicated region
      $region49: #{_lambda_.6} parent=47 // pred_check
        %p278 = pneg %p35
      $region50: #{_lambda_.6} parent=47 // pred_check_branch
        %280 = sbr.rel (%p278) target = $region52
      $region51: #{_lambda_.6} parent=47 // pred_region
        %p281 = scmp.lt.s32.totalorder %s15, 1
        %s282 = scalar_select %p281, %s15, 1
        %s283 = smul.addr %s282, 8
        %s284 = scalar_lea.vmem %s0, %s283
      $region52: #{_lambda_.6} parent=47 // pred_fallthru
        _
    $region48: #{_lambda_.6} parent=5 // pred_fallthru
      _
    %p285 = scmp.le.s32.totalorder 1, %s15
    %p286 = scmp.lt.s32.totalorder %s15, 3
    %p287 = pnand %p285, %p286
    %p288 = pneg %p287
    // Predicated region
    $region53: #{_lambda_.6} parent=5 // pred_check
      _
    $region54: #{_lambda_.6} parent=5 // pred_check_branch
      %290 = sbr.rel (%p287) target = $region56
    $region55: #{_lambda_.6} parent=5 // pred_region
      %s291 = ssub.s32 %s15, 1
      %p292 = scmp.lt.s32.totalorder %s20, 1
      %s293 = scalar_select %p292, %s20, 1
      %s294 = smul.addr %s293, 8
      %s295 = scalar_lea.vmem %s0, %s294
      %p296 = pneg %p41
      %p297 = pneg %p38
      %p298 = pneg %p62
      %p299 = pneg %p59
      %p300 = pneg %p83
      %p301 = pneg %p80
      %p302 = pneg %p104
      %p303 = pneg %p101
      %p304 = pneg %p125
      %p305 = pneg %p122
      %p306 = pneg %p146
      %p307 = pneg %p143
      %p308 = pneg %p167
      %p309 = pneg %p164
      %p310 = pneg %p188
      %p311 = pneg %p185
      %p312 = pneg %p209
      %p313 = pneg %p206
      %p314 = pneg %p235
      %p315 = pneg %p232
      %p316 = scmp.lt.s32.totalorder %s20, 1
      %s317 = scalar_select %p316, %s20, 1
      %s318 = smul.addr %s317, 8
      %s319 = scalar_lea.vmem %s9, %s318
      %p320 = scmp.lt.s32.totalorder %s20, 1
      %s321 = scalar_select %p320, %s20, 1
      %s322 = smul.addr %s321, 8
      %s323 = scalar_lea.vmem %s0, %s322
      %p324 = scmp.lt.s32.totalorder %s20, 1
      %s325 = scalar_select %p324, %s20, 1
      %s326 = smul.addr %s325, 8
      %s327 = scalar_lea.vmem %s9, %s326
      %v328 = vld [vmem:[%s323] sm:$0xff]
      %v329 = vld [vmem:[%s1] sm:$0xff]
      %v330 = vld [vmem:[%s2] sm:$0xff]
      %vm331 = vcmp.ge.f32.partialorder %v328, 0.0
      %v332 = vmul.f32 %v328, 0.1
      %v333 = vsel %vm331, %v328, %v332
      %vm334 = vcmask 7168
      %335 = vst.msk [vmem:[#allocation2] sm:$0xff] %vm334, 0.0
      %337 = vrot.lane.b32.xlu0 %v333, 1
      %v338 = vpop.permute.xlu0 %337
      %vm340 = vcmask 261128
      %341 = vst.msk [vmem:[#allocation2] sm:$0xff] %vm340, %v338
      %vm342 = vcmask 261120
      %343 = vst.msk [vmem:[#allocation2 + $0x8] sm:$0xff] %vm342, %v333
      %vm344 = vcmask 261368
      %345 = vst.msk [vmem:[#allocation2 + $0x10] sm:$0xff] %vm344, 0.0
      %346 = vrot.lane.b32.xlu0 %v333, 127
      %v347 = vpop.permute.xlu0 %346
      %vm349 = vcmask 252928
      %350 = vst.msk [vmem:[#allocation2 + $0x10] sm:$0xff] %vm349, %v347
      %v351 = vld [vmem:[#allocation2] sm:$0xff]
      %v352 = vld [vmem:[#allocation2 + $0x8] sm:$0xff]
      %v353 = vld [vmem:[#allocation2 + $0x10] sm:$0xff]
      %355 = vset.pattern.permute.xlu0 0
      %356 = vperm.xlu0 %355, %v330
      %v357 = vpop.permute.xlu0 %356
      %vm359 = vcmask 195584
      %v361 = vsel %vm359, %v329, 0
      %363 = vmatprep.subr.mxu0 0.0
      %364 = vmatpush1.msra.mxu0 %v351
      %365 = vmatprep.subr.mxu0 0.0
      %366 = vmatpush1.msra.mxu0 %v352
      %367 = vmatprep.subr.mxu0 0.0
      %368 = vmatpush1.msra.mxu0 %v353
      %369 = vmatprep.subr.mxu0 0.0
      %370 = vmatpush1.msra.mxu0 0.0
      %371 = vmatprep.subr.mxu0 0.0
      %372 = vmatpush1.msra.mxu0 0.0
      %373 = vmatprep.subr.mxu0 0.0
      %374 = vmatpush1.msra.mxu0 0.0
      %375 = vmatprep.subr.mxu0 0.0
      %376 = vmatpush1.msra.mxu0 0.0
      %377 = vmatprep.subr.mxu0 0.0
      %378 = vmatpush1.msra.mxu0 0.0
      %379 = vmatprep.subr.mxu0 0.0
      %380 = vmatpush1.msra.mxu0 0.0
      %381 = vmatprep.subr.mxu0 0.0
      %382 = vmatpush1.msra.mxu0 0.0
      %383 = vmatprep.subr.mxu0 0.0
      %384 = vmatpush1.msra.mxu0 0.0
      %385 = vmatprep.subr.mxu0 0.0
      %386 = vmatpush1.msra.mxu0 0.0
      %387 = vmatprep.subr.mxu0 0.0
      %388 = vmatpush1.msra.mxu0 0.0
      %389 = vmatprep.subr.mxu0 0.0
      %390 = vmatpush1.msra.mxu0 0.0
      %391 = vmatprep.subr.mxu0 0.0
      %392 = vmatpush1.msra.mxu0 0.0
      %393 = vmatprep.subr.mxu0 0.0
      %394 = vmatpush1.msra.mxu0 0.0
      %395 = vmatprep.subr.mxu0 0.0
      %396 = vmatpush1.msra.mxu0 0.0
      %397 = vmatprep.subr.mxu0 0.0
      %398 = vmatpush1.msra.mxu0 0.0
      %399 = vmatprep.subr.mxu0 0.0
      %400 = vmatpush1.msra.mxu0 0.0
      %401 = vmatprep.subr.mxu0 0.0
      %402 = vmatpush1.msra.mxu0 0.0
      %403 = vmatprep.subr.mxu0 0.0
      %404 = vmatpush1.msra.mxu0 0.0
      %405 = vmatprep.subr.mxu0 0.0
      %406 = vmatpush1.msra.mxu0 0.0
      %407 = vmatprep.subr.mxu0 0.0
      %408 = vmatpush1.msra.mxu0 0.0
      %409 = vmatprep.subr.mxu0 0.0
      %410 = vmatpush1.msra.mxu0 0.0
      %411 = vmatprep.subr.mxu0 0.0
      %412 = vmatpush1.msra.mxu0 0.0
      %413 = vmatprep.subr.mxu0 0.0
      %414 = vmatpush1.msra.mxu0 0.0
      %415 = vmatprep.subr.mxu0 0.0
      %416 = vmatpush1.msra.mxu0 0.0
      %417 = vmatprep.subr.mxu0 0.0
      %418 = vmatpush1.msra.mxu0 0.0
      %419 = vmatprep.subr.mxu0 0.0
      %420 = vmatpush1.msra.mxu0 0.0
      %421 = vmatprep.subr.mxu0 0.0
      %422 = vmatpush1.msra.mxu0 0.0
      %423 = vmatprep.subr.mxu0 0.0
      %424 = vmatpush1.msra.mxu0 0.0
      %425 = vmatprep.subr.mxu0 0.0
      %426 = vmatpush1.msra.mxu0 0.0
      %427 = vmatprep.mubr.f32.mxu0 0.0
      %428 = vmatmul.mubr.f32.gmra.mrb[0].mxu0 %v361
      %v429 = vpop.f32.mrb[0].mxu0
      %v430 = vadd.f32 %v357, %v429
      %v431 = vpop.f32.mrb[0].mxu0
      %432 = vdwg.mxu0
      %v433 = vld [vmem:[%s3] sm:$0xff]
      %v434 = vld [vmem:[%s4] sm:$0xff]
      %vm435 = vcmp.ge.f32.partialorder %v430, 0.0
      %v436 = vmul.f32 %v430, 0.1
      %v437 = vsel %vm435, %v430, %v436
      %vm438 = vcmask 15360
      %439 = vst.msk [vmem:[#allocation2] sm:$0xff] %vm438, 0.0
      %441 = vrot.lane.b32.xlu0 %v437, 2
      %v442 = vpop.permute.xlu0 %441
      %vm444 = vcmask 261136
      %445 = vst.msk [vmem:[#allocation2] sm:$0xff] %vm444, %v442
      %446 = vst.msk [vmem:[#allocation2 + $0x8] sm:$0xff] %vm342, %v437
      %vm447 = vcmask 261360
      %448 = vst.msk [vmem:[#allocation2 + $0x10] sm:$0xff] %vm447, 0.0
      %449 = vrot.lane.b32.xlu0 %v437, 126
      %v450 = vpop.permute.xlu0 %449
      %vm452 = vcmask 244736
      %453 = vst.msk [vmem:[#allocation2 + $0x10] sm:$0xff] %vm452, %v450
      %v454 = vld [vmem:[#allocation2] sm:$0xff]
      %v455 = vld [vmem:[#allocation2 + $0x8] sm:$0xff]
      %v456 = vld [vmem:[#allocation2 + $0x10] sm:$0xff]
      %458 = vset.pattern.permute.xlu0 0
      %459 = vperm.xlu0 %458, %v434
      %v460 = vpop.permute.xlu0 %459
      %v463 = vsel %vm359, %v433, 0
      %465 = vmatprep.subr.mxu0 0.0
      %466 = vmatpush1.msra.mxu0 %v454
      %467 = vmatprep.subr.mxu0 0.0
      %468 = vmatpush1.msra.mxu0 %v455
      %469 = vmatprep.subr.mxu0 0.0
      %470 = vmatpush1.msra.mxu0 %v456
      %471 = vmatprep.subr.mxu0 0.0
      %472 = vmatpush1.msra.mxu0 0.0
      %473 = vmatprep.subr.mxu0 0.0
      %474 = vmatpush1.msra.mxu0 0.0
      %475 = vmatprep.subr.mxu0 0.0
      %476 = vmatpush1.msra.mxu0 0.0
      %477 = vmatprep.subr.mxu0 0.0
      %478 = vmatpush1.msra.mxu0 0.0
      %479 = vmatprep.subr.mxu0 0.0
      %480 = vmatpush1.msra.mxu0 0.0
      %481 = vmatprep.subr.mxu0 0.0
      %482 = vmatpush1.msra.mxu0 0.0
      %483 = vmatprep.subr.mxu0 0.0
      %484 = vmatpush1.msra.mxu0 0.0
      %485 = vmatprep.subr.mxu0 0.0
      %486 = vmatpush1.msra.mxu0 0.0
      %487 = vmatprep.subr.mxu0 0.0
      %488 = vmatpush1.msra.mxu0 0.0
      %489 = vmatprep.subr.mxu0 0.0
      %490 = vmatpush1.msra.mxu0 0.0
      %491 = vmatprep.subr.mxu0 0.0
      %492 = vmatpush1.msra.mxu0 0.0
      %493 = vmatprep.subr.mxu0 0.0
      %494 = vmatpush1.msra.mxu0 0.0
      %495 = vmatprep.subr.mxu0 0.0
      %496 = vmatpush1.msra.mxu0 0.0
      %497 = vmatprep.subr.mxu0 0.0
      %498 = vmatpush1.msra.mxu0 0.0
      %499 = vmatprep.subr.mxu0 0.0
      %500 = vmatpush1.msra.mxu0 0.0
      %501 = vmatprep.subr.mxu0 0.0
      %502 = vmatpush1.msra.mxu0 0.0
      %503 = vmatprep.subr.mxu0 0.0
      %504 = vmatpush1.msra.mxu0 0.0
      %505 = vmatprep.subr.mxu0 0.0
      %506 = vmatpush1.msra.mxu0 0.0
      %507 = vmatprep.subr.mxu0 0.0
      %508 = vmatpush1.msra.mxu0 0.0
      %509 = vmatprep.subr.mxu0 0.0
      %510 = vmatpush1.msra.mxu0 0.0
      %511 = vmatprep.subr.mxu0 0.0
      %512 = vmatpush1.msra.mxu0 0.0
      %513 = vmatprep.subr.mxu0 0.0
      %514 = vmatpush1.msra.mxu0 0.0
      %515 = vmatprep.subr.mxu0 0.0
      %516 = vmatpush1.msra.mxu0 0.0
      %517 = vmatprep.subr.mxu0 0.0
      %518 = vmatpush1.msra.mxu0 0.0
      %519 = vmatprep.subr.mxu0 0.0
      %520 = vmatpush1.msra.mxu0 0.0
      %521 = vmatprep.subr.mxu0 0.0
      %522 = vmatpush1.msra.mxu0 0.0
      %523 = vmatprep.subr.mxu0 0.0
      %524 = vmatpush1.msra.mxu0 0.0
      %525 = vmatprep.subr.mxu0 0.0
      %526 = vmatpush1.msra.mxu0 0.0
      %527 = vmatprep.subr.mxu0 0.0
      %528 = vmatpush1.msra.mxu0 0.0
      %529 = vmatprep.mubr.f32.mxu0 0.0
      %530 = vmatmul.mubr.f32.gmra.mrb[0].mxu0 %v463
      %v531 = vpop.f32.mrb[0].mxu0
      %v532 = vadd.f32 %v460, %v531
      %v533 = vpop.f32.mrb[0].mxu0
      %534 = vdwg.mxu0
      %v535 = vadd.f32 %v328, %v532
      %v536 = vld [vmem:[%s5] sm:$0xff]
      %v537 = vld [vmem:[%s6] sm:$0xff]
      %538 = vst.msk [vmem:[#allocation2] sm:$0xff] %vm438, 0.0
      %539 = vrot.lane.b32.xlu0 %v333, 2
      %v540 = vpop.permute.xlu0 %539
      %542 = vst.msk [vmem:[#allocation2] sm:$0xff] %vm444, %v540
      %543 = vst.msk [vmem:[#allocation2 + $0x8] sm:$0xff] %vm334, 0.0
      %544 = vst.msk [vmem:[#allocation2 + $0x8] sm:$0xff] %vm340, %v338
      %545 = vst.msk [vmem:[#allocation2 + $0x10] sm:$0xff] %vm342, %v333
      %546 = vst.msk [vmem:[#allocation2 + $0x18] sm:$0xff] %vm344, 0.0
      %547 = vst.msk [vmem:[#allocation2 + $0x18] sm:$0xff] %vm349, %v347
      %548 = vst.msk [vmem:[#allocation2 + $0x20] sm:$0xff] %vm447, 0.0
      %549 = vrot.lane.b32.xlu0 %v333, 126
      %v550 = vpop.permute.xlu0 %549
      %552 = vst.msk [vmem:[#allocation2 + $0x20] sm:$0xff] %vm452, %v550
      %v553 = vld [vmem:[#allocation2] sm:$0xff]
      %v554 = vld [vmem:[#allocation2 + $0x8] sm:$0xff]
      %v555 = vld [vmem:[#allocation2 + $0x10] sm:$0xff]
      %v556 = vld [vmem:[#allocation2 + $0x18] sm:$0xff]
      %v557 = vld [vmem:[#allocation2 + $0x20] sm:$0xff]
      %559 = vset.pattern.permute.xlu0 0
      %560 = vperm.xlu0 %559, %v537
      %v561 = vpop.permute.xlu0 %560
      %vm563 = vcmask 326656
      %v565 = vsel %vm563, %v536, 0
      %567 = vmatprep.subr.mxu0 0.0
      %568 = vmatpush1.msra.mxu0 %v553
      %569 = vmatprep.subr.mxu0 0.0
      %570 = vmatpush1.msra.mxu0 %v554
      %571 = vmatprep.subr.mxu0 0.0
      %572 = vmatpush1.msra.mxu0 %v555
      %573 = vmatprep.subr.mxu0 0.0
      %574 = vmatpush1.msra.mxu0 %v556
      %575 = vmatprep.subr.mxu0 0.0
      %576 = vmatpush1.msra.mxu0 %v557
      %577 = vmatprep.subr.mxu0 0.0
      %578 = vmatpush1.msra.mxu0 0.0
      %579 = vmatprep.subr.mxu0 0.0
      %580 = vmatpush1.msra.mxu0 0.0
      %581 = vmatprep.subr.mxu0 0.0
      %582 = vmatpush1.msra.mxu0 0.0
      %583 = vmatprep.subr.mxu0 0.0
      %584 = vmatpush1.msra.mxu0 0.0
      %585 = vmatprep.subr.mxu0 0.0
      %586 = vmatpush1.msra.mxu0 0.0
      %587 = vmatprep.subr.mxu0 0.0
      %588 = vmatpush1.msra.mxu0 0.0
      %589 = vmatprep.subr.mxu0 0.0
      %590 = vmatpush1.msra.mxu0 0.0
      %591 = vmatprep.subr.mxu0 0.0
      %592 = vmatpush1.msra.mxu0 0.0
      %593 = vmatprep.subr.mxu0 0.0
      %594 = vmatpush1.msra.mxu0 0.0
      %595 = vmatprep.subr.mxu0 0.0
      %596 = vmatpush1.msra.mxu0 0.0
      %597 = vmatprep.subr.mxu0 0.0
      %598 = vmatpush1.msra.mxu0 0.0
      %599 = vmatprep.subr.mxu0 0.0
      %600 = vmatpush1.msra.mxu0 0.0
      %601 = vmatprep.subr.mxu0 0.0
      %602 = vmatpush1.msra.mxu0 0.0
      %603 = vmatprep.subr.mxu0 0.0
      %604 = vmatpush1.msra.mxu0 0.0
      %605 = vmatprep.subr.mxu0 0.0
      %606 = vmatpush1.msra.mxu0 0.0
      %607 = vmatprep.subr.mxu0 0.0
      %608 = vmatpush1.msra.mxu0 0.0
      %609 = vmatprep.subr.mxu0 0.0
      %610 = vmatpush1.msra.mxu0 0.0
      %611 = vmatprep.subr.mxu0 0.0
      %612 = vmatpush1.msra.mxu0 0.0
      %613 = vmatprep.subr.mxu0 0.0
      %614 = vmatpush1.msra.mxu0 0.0
      %615 = vmatprep.subr.mxu0 0.0
      %616 = vmatpush1.msra.mxu0 0.0
      %617 = vmatprep.subr.mxu0 0.0
      %618 = vmatpush1.msra.mxu0 0.0
      %619 = vmatprep.subr.mxu0 0.0
      %620 = vmatpush1.msra.mxu0 0.0
      %621 = vmatprep.subr.mxu0 0.0
      %622 = vmatpush1.msra.mxu0 0.0
      %623 = vmatprep.subr.mxu0 0.0
      %624 = vmatpush1.msra.mxu0 0.0
      %625 = vmatprep.subr.mxu0 0.0
      %626 = vmatpush1.msra.mxu0 0.0
      %627 = vmatprep.subr.mxu0 0.0
      %628 = vmatpush1.msra.mxu0 0.0
      %629 = vmatprep.subr.mxu0 0.0
      %630 = vmatpush1.msra.mxu0 0.0
      %631 = vmatprep.mubr.f32.mxu0 0.0
      %632 = vmatmul.mubr.f32.gmra.mrb[0].mxu0 %v565
      %v633 = vpop.f32.mrb[0].mxu0
      %v634 = vadd.f32 %v561, %v633
      %v635 = vpop.f32.mrb[0].mxu0
      %636 = vdwg.mxu0
      %v637 = vadd.f32 %v328, %v634
      %v638 = vld [vmem:[%s7] sm:$0xff]
      %v639 = vld [vmem:[%s8] sm:$0xff]
      %vm640 = vcmp.ge.f32.partialorder %v637, 0.0
      %v641 = vmul.f32 %v637, 0.1
      %v642 = vsel %vm640, %v637, %v641
      %vm643 = vcmask 48128
      %644 = vst.msk [vmem:[#allocation2] sm:$0xff] %vm643, 0.0
      %646 = vrot.lane.b32.xlu0 %v642, 6
      %v647 = vpop.permute.xlu0 %646
      %vm649 = vcmask 261168
      %650 = vst.msk [vmem:[#allocation2] sm:$0xff] %vm649, %v647
      %vm651 = vcmask 23552
      %652 = vst.msk [vmem:[#allocation2 + $0x8] sm:$0xff] %vm651, 0.0
      %653 = vrot.lane.b32.xlu0 %v642, 3
      %v654 = vpop.permute.xlu0 %653
      %vm656 = vcmask 261144
      %657 = vst.msk [vmem:[#allocation2 + $0x8] sm:$0xff] %vm656, %v654
      %658 = vst.msk [vmem:[#allocation2 + $0x10] sm:$0xff] %vm342, %v642
      %vm659 = vcmask 261352
      %660 = vst.msk [vmem:[#allocation2 + $0x18] sm:$0xff] %vm659, 0.0
      %661 = vrot.lane.b32.xlu0 %v642, 125
      %v662 = vpop.permute.xlu0 %661
      %vm664 = vcmask 236544
      %665 = vst.msk [vmem:[#allocation2 + $0x18] sm:$0xff] %vm664, %v662
      %vm666 = vcmask 261328
      %667 = vst.msk [vmem:[#allocation2 + $0x20] sm:$0xff] %vm666, 0.0
      %668 = vrot.lane.b32.xlu0 %v642, 122
      %v669 = vpop.permute.xlu0 %668
      %vm671 = vcmask 211968
      %672 = vst.msk [vmem:[#allocation2 + $0x20] sm:$0xff] %vm671, %v669
      %v673 = vld [vmem:[#allocation2] sm:$0xff]
      %v674 = vld [vmem:[#allocation2 + $0x8] sm:$0xff]
      %v675 = vld [vmem:[#allocation2 + $0x10] sm:$0xff]
      %v676 = vld [vmem:[#allocation2 + $0x18] sm:$0xff]
      %v677 = vld [vmem:[#allocation2 + $0x20] sm:$0xff]
      %679 = vset.pattern.permute.xlu0 0
      %680 = vperm.xlu0 %679, %v639
      %v681 = vpop.permute.xlu0 %680
      %v684 = vsel %vm563, %v638, 0
      %686 = vmatprep.subr.mxu0 0.0
      %687 = vmatpush1.msra.mxu0 %v673
      %688 = vmatprep.subr.mxu0 0.0
      %689 = vmatpush1.msra.mxu0 %v674
      %690 = vmatprep.subr.mxu0 0.0
      %691 = vmatpush1.msra.mxu0 %v675
      %692 = vmatprep.subr.mxu0 0.0
      %693 = vmatpush1.msra.mxu0 %v676
      %694 = vmatprep.subr.mxu0 0.0
      %695 = vmatpush1.msra.mxu0 %v677
      %696 = vmatprep.subr.mxu0 0.0
      %697 = vmatpush1.msra.mxu0 0.0
      %698 = vmatprep.subr.mxu0 0.0
      %699 = vmatpush1.msra.mxu0 0.0
      %700 = vmatprep.subr.mxu0 0.0
      %701 = vmatpush1.msra.mxu0 0.0
      %702 = vmatprep.subr.mxu0 0.0
      %703 = vmatpush1.msra.mxu0 0.0
      %704 = vmatprep.subr.mxu0 0.0
      %705 = vmatpush1.msra.mxu0 0.0
      %706 = vmatprep.subr.mxu0 0.0
      %707 = vmatpush1.msra.mxu0 0.0
      %708 = vmatprep.subr.mxu0 0.0
      %709 = vmatpush1.msra.mxu0 0.0
      %710 = vmatprep.subr.mxu0 0.0
      %711 = vmatpush1.msra.mxu0 0.0
      %712 = vmatprep.subr.mxu0 0.0
      %713 = vmatpush1.msra.mxu0 0.0
      %714 = vmatprep.subr.mxu0 0.0
      %715 = vmatpush1.msra.mxu0 0.0
      %716 = vmatprep.subr.mxu0 0.0
      %717 = vmatpush1.msra.mxu0 0.0
      %718 = vmatprep.subr.mxu0 0.0
      %719 = vmatpush1.msra.mxu0 0.0
      %720 = vmatprep.subr.mxu0 0.0
      %721 = vmatpush1.msra.mxu0 0.0
      %722 = vmatprep.subr.mxu0 0.0
      %723 = vmatpush1.msra.mxu0 0.0
      %724 = vmatprep.subr.mxu0 0.0
      %725 = vmatpush1.msra.mxu0 0.0
      %726 = vmatprep.subr.mxu0 0.0
      %727 = vmatpush1.msra.mxu0 0.0
      %728 = vmatprep.subr.mxu0 0.0
      %729 = vmatpush1.msra.mxu0 0.0
      %730 = vmatprep.subr.mxu0 0.0
      %731 = vmatpush1.msra.mxu0 0.0
      %732 = vmatprep.subr.mxu0 0.0
      %733 = vmatpush1.msra.mxu0 0.0
      %734 = vmatprep.subr.mxu0 0.0
      %735 = vmatpush1.msra.mxu0 0.0
      %736 = vmatprep.subr.mxu0 0.0
      %737 = vmatpush1.msra.mxu0 0.0
      %738 = vmatprep.subr.mxu0 0.0
      %739 = vmatpush1.msra.mxu0 0.0
      %740 = vmatprep.subr.mxu0 0.0
      %741 = vmatpush1.msra.mxu0 0.0
      %742 = vmatprep.subr.mxu0 0.0
      %743 = vmatpush1.msra.mxu0 0.0
      %744 = vmatprep.subr.mxu0 0.0
      %745 = vmatpush1.msra.mxu0 0.0
      %746 = vmatprep.subr.mxu0 0.0
      %747 = vmatpush1.msra.mxu0 0.0
      %748 = vmatprep.subr.mxu0 0.0
      %749 = vmatpush1.msra.mxu0 0.0
      %750 = vmatprep.mubr.f32.mxu0 0.0
      %751 = vmatmul.mubr.f32.gmra.mrb[0].mxu0 %v684
      %v752 = vpop.f32.mrb[0].mxu0
      %v753 = vadd.f32 %v681, %v752
      %v754 = vpop.f32.mrb[0].mxu0
      %755 = vdwg.mxu0
      %v756 = vadd.f32 %v637, %v753
      %v757 = vadd.f32 %v535, %v756
      %v758 = vmul.f32 %v757, 0.5
      %759 = vst.msk [vmem:[%s327] sm:$0xff] %vm342, %v758
      %p760 = scmp.lt.s32.totalorder %s20, 1
      %s761 = scalar_select %p760, %s20, 1
      %s762 = smul.addr %s761, 8
      %s763 = scalar_lea.vmem %s9, %s762
      // Predicated region
      $region57: #{_lambda_.6} parent=55 // pred_check
        %p764 = pneg %p232
      $region58: #{_lambda_.6} parent=55 // pred_check_branch
        %766 = sbr.rel (%p764) target = $region60
      $region59: #{_lambda_.6} parent=55 // pred_region
        _
      $region60: #{_lambda_.6} parent=55 // pred_fallthru
        _
    $region56: #{_lambda_.6} parent=5 // pred_fallthru
      _
    %p767 = scmp.le.s32.totalorder 2, %s15
    // Predicated region
    $region61: #{_lambda_.6} parent=5 // pred_check
      %p768 = pneg %p767
    $region62: #{_lambda_.6} parent=5 // pred_check_branch
      %770 = sbr.rel (%p768) target = $region64
    $region63: #{_lambda_.6} parent=5 // pred_region
      %s771 = ssub.s32 %s15, 2
      // Predicated region
      $region65: #{_lambda_.6} parent=63 // pred_check
        %p772 = pneg %p238
      $region66: #{_lambda_.6} parent=63 // pred_check_branch
        %774 = sbr.rel (%p772) target = $region68
      $region67: #{_lambda_.6} parent=63 // pred_region
        %p775 = scmp.lt.s32.totalorder %s21, 1
        %s776 = scalar_select %p775, %s21, 1
        %s777 = smul.addr %s776, 8
        %s778 = scalar_lea.vmem %s9, %s777
      $region68: #{_lambda_.6} parent=63 // pred_fallthru
        _
    $region64: #{_lambda_.6} parent=5 // pred_fallthru
      _
  $region6: #{_lambda_.6} parent=0 // loop_footer
    %s19 = sadd.s32 1, %s15
  $region7: #{_lambda_.6} parent=0 // loop_footer_branch
    %14 = sbr.rel target = $region3
  $region8: #{_lambda_.6} parent=0 // loop_exit
    _

</llo_original>
